<compile_context>
chip_gen: v6e
topology: v6e:2x2x1
jax: 0.10.0
libtpu: 0.0.40
codegen_flags: <defaults>
</compile_context>

<pallas_src>
import functools

import numpy as np
import jax
import jax.numpy as jnp
from jax import lax
from jax.experimental import pallas as pl
from jax.experimental.pallas import tpu as pltpu

MM_DTYPE = jnp.bfloat16        # MXU operand dtype (accumulation stays float32)
SLAB_LANES = 256               # lane width of the packed constant slabs

# tap order for the 3x3 convs (dy, dx); index 4 is the centre tap
TAP_OFFS = ((-1, -1), (-1, 0), (-1, 1),
            (0, -1),  (0, 0),  (0, 1),
            (1, -1),  (1, 0),  (1, 1))


def _pad8(n):
    return ((n + 7) // 8) * 8


# --------------------------------------------------------------------------
# In-kernel building blocks. Activations are (C_pad, H*W): channels on
# sublanes (padded to a multiple of 8 with exactly-zero rows), spatial on
# lanes in row-major (h*W + w) order.
# --------------------------------------------------------------------------
def _resblock(x, km, w_ref, b_ref, m_ref):
    HW, Wd = km['HW'], km['W']
    cpo = km['cp_out']

    # 9 shifted taps built in-register: lane roll + precomputed boundary mask.
    taps = []
    k = 0
    for (dy, dx) in TAP_OFFS:
        if dy == 0 and dx == 0:
            taps.append(x)                                        # centre tap
            continue
        shift = dy * Wd + dx
        rolled = pltpu.roll(x, shift=(-shift) % HW, axis=1)
        mask = m_ref[km['m_off'] + k: km['m_off'] + k + 1, 0:HW]  # (1, HW)
        taps.append(rolled * mask)
        k += 1
    xcol = jnp.concatenate(taps, axis=0).astype(MM_DTYPE)          # (9*Cin_p, HW)

    # conv3x3 (+ folded 1x1 shortcut rows) as ONE lane-dense MXU matmul.
    Wc = w_ref[km['w_off']: km['w_off'] + km['w_rows'], 0:km['w_cols']]
    y = jnp.dot(Wc, xcol, preferred_element_type=jnp.float32)      # (w_rows, HW)

    b3 = b_ref[0:cpo, km['b3_col']: km['b3_col'] + 1]              # (Cout_p, 1)
    if km['has_proj']:
        r = y[:cpo] + b3
        s = y[cpo:2 * cpo] + b_ref[0:cpo, km['bp_col']: km['bp_col'] + 1]
    else:
        r = y + b3
        s = x                                                      # identity shortcut
    r = jnp.maximum(r, 0.2 * r)                                    # LeakyReLU(0.2)
    out = r + s

    if km['downsample']:
        # bilinear 0.5x (align_corners=False) == exact 2x2 avg pool; linear,
        # so applied ONCE after the residual add as a lane-dense matmul.
        PT = w_ref[km['p_off']: km['p_off'] + HW, 0:HW // 4]
        out = jnp.dot(out.astype(MM_DTYPE), PT,
                      preferred_element_type=jnp.float32)          # (Cout_p, HW/4)
    return out


def _make_kernel(kmeta):
    inm, blocks, head = kmeta['input'], kmeta['blocks'], kmeta['head']

    def kernel(x_ref, ce_ref, w_ref, b_ref, m_ref, o_ref):
        # ---- input 1x1 conv:  Win(Cp1, Cimg) @ img(Cimg, HW0) + b
        img = x_ref[0].astype(MM_DTYPE)                            # (Cimg, HW0)
        Win = w_ref[inm['w_off']: inm['w_off'] + inm['w_rows'], 0:inm['w_cols']]
        x = (jnp.dot(Win, img, preferred_element_type=jnp.float32)
             + b_ref[0:inm['w_rows'], inm['b_col']: inm['b_col'] + 1])

        # ---- residual tower (activations never leave VMEM / vregs)
        for km in blocks:
            x = _resblock(x, km, w_ref, b_ref, m_ref)

        # ---- head: flatten_conv (4x4 VALID) + Linear + <c_emb, feat>.
        # z[co] = sum_{ci,hw} x[ci,hw] * Wf[co,ci,hw] done via
        #   R = x @ Wbig    (Wbig[hw, ci*C+co] = Wf[co,ci,hw])
        #   s = sum_sublanes(R * Dmask)   (keeps only rows ci'==ci)
        # then the Linear layer + flatten/Linear biases are folded into Wsl.
        xh = x.astype(MM_DTYPE)                                    # (Cp, HWf)
        Wbig = w_ref[head['wbig_off']: head['wbig_off'] + head['hwf'],
                     0:head['kcols']]
        R = jnp.dot(xh, Wbig, preferred_element_type=jnp.float32)  # (Cp, Cp*C)
        Dm = m_ref[head['dm_off']: head['dm_off'] + head['cp'], 0:head['kcols']]
        s = jnp.sum(R * Dm, axis=0, keepdims=True)                 # (1, Cp*C)
        Wsl = w_ref[head['wsl_off']: head['wsl_off'] + head['kcols'],
                    0:head['c']]
        feat = jnp.dot(s.astype(MM_DTYPE), Wsl,
                       preferred_element_type=jnp.float32)         # (1, C)
        feat = feat + m_ref[head['bf_off']: head['bf_off'] + 1, 0:head['c']]
        cemb = ce_ref[0]                                           # (1, C)
        o_ref[0] = jnp.sum(cemb * feat, axis=1, keepdims=True)     # (1, 1)

    return kernel


# --------------------------------------------------------------------------
# Host-side packing: everything constant goes into three slabs.
# --------------------------------------------------------------------------
def _tap_masks(H, W):
    """(8, H*W) boundary-validity masks for the non-centre taps."""
    m = np.zeros((8, H * W), np.float32)
    k = 0
    for (dy, dx) in TAP_OFFS:
        if dy == 0 and dx == 0:
            continue
        for r in range(H):
            for c in range(W):
                if 0 <= r + dy < H and 0 <= c + dx < W:
                    m[k, r * W + c] = 1.0
        k += 1
    return m


def _pool_matrix_T(H, W):
    """(H*W, H*W/4) operator: y(C,HW) @ P^T == 2x2 average pool (row-major)."""
    Ho, Wo = H // 2, W // 2
    P = np.zeros((H * W, Ho * Wo), np.float32)
    for i in range(Ho):
        for j in range(Wo):
            q = i * Wo + j
            for di in range(2):
                for dj in range(2):
                    P[(2 * i + di) * W + (2 * j + dj), q] = 0.25
    return P


def pack_model(plan, params):
    cimg = params['in_w'].shape[0]
    c0 = params['in_w'].shape[1]
    bias_rows = _pad8(max([c0] + [blk['cout'] for blk in plan]))

    wparts, bparts, mparts = [], [], []
    wrow, mrow = [0], [0]

    def add_w(a):                                  # rows % 8 == 0, cols <= 256
        rows, cols = a.shape
        assert rows % 8 == 0 and cols <= SLAB_LANES
        p = np.zeros((rows, SLAB_LANES), np.float32)
        p[:, :cols] = a
        off = wrow[0]
        wparts.append(p)
        wrow[0] += rows
        return off

    def add_b(vec):
        col = np.zeros((bias_rows,), np.float32)
        v = np.asarray(vec, np.float32)
        col[:v.shape[0]] = v
        bparts.append(col)
        return len(bparts) - 1

    def add_m(a):
        rows, cols = a.shape
        assert cols <= SLAB_LANES
        p = np.zeros((_pad8(rows), SLAB_LANES), np.float32)
        p[:rows, :cols] = a
        off = mrow[0]
        mparts.append(p)
        mrow[0] += p.shape[0]
        return off

    # input 1x1 conv
    cp1 = _pad8(c0)
    Win = np.zeros((cp1, cimg), np.float32)
    Win[:c0, :] = np.asarray(params['in_w'], np.float32).T
    inm = dict(w_off=add_w(Win), w_rows=cp1, w_cols=cimg,
               b_col=add_b(params['in_b']))

    # residual blocks
    mask_off_by_res = {}
    kblocks = []
    for blk, bw in zip(plan, params['blocks']):
        cin, cout = blk['cin'], blk['cout']
        cpi, cpo = _pad8(cin), _pad8(cout)
        H, W = blk['H'], blk['W']
        HW = H * W
        if (H, W) not in mask_off_by_res:
            mask_off_by_res[(H, W)] = add_m(_tap_masks(H, W))

        rows = 2 * cpo if blk['has_proj'] else cpo
        Wc = np.zeros((rows, 9 * cpi), np.float32)
        w3 = np.asarray(bw['w3'], np.float32)                     # (3,3,cin,cout) HWIO
        for t, (dy, dx) in enumerate(TAP_OFFS):
            Wc[:cout, t * cpi: t * cpi + cin] = w3[dy + 1, dx + 1].T
        km = dict(H=H, W=W, HW=HW, cp_in=cpi, cp_out=cpo,
                  has_proj=blk['has_proj'], downsample=blk['downsample'],
                  w_cols=9 * cpi, m_off=mask_off_by_res[(H, W)],
                  b3_col=add_b(bw['b3']))
        if blk['has_proj']:
            # 1x1 shortcut folded into the same matmul: extra output rows with
            # weights at the centre-tap columns (bias kept separate).
            Wc[cpo:cpo + cout, 4 * cpi: 4 * cpi + cin] = \
                np.asarray(bw['wp'], np.float32).T
            km['bp_col'] = add_b(bw['bp'])
        km['w_off'] = add_w(Wc)
        km['w_rows'] = rows
        if blk['downsample']:
            km['p_off'] = add_w(_pool_matrix_T(H, W))
        kblocks.append(km)

    # head (flatten_conv + feature_layer; biases folded)
    last = plan[-1]
    Hf, Wf = last['Hout'], last['Wout']
    HWf = Hf * Wf
    C = last['cout']
    cp = _pad8(C)
    assert HWf % 8 == 0 and cp * C <= SLAB_LANES
    flat_w = np.asarray(params['flat_w'], np.float32).reshape(HWf, C, C)  # (hw,ci,co)
    Wbig = np.zeros((HWf, cp * C), np.float32)
    for ci in range(C):
        Wbig[:, ci * C:(ci + 1) * C] = flat_w[:, ci, :]
    Dm = np.zeros((cp, cp * C), np.float32)
    for ci in range(cp):
        Dm[ci, ci * C:(ci + 1) * C] = 1.0
    lin_w = np.asarray(params['lin_w'], np.float32)               # (in, out)
    Wsl = np.zeros((cp * C, C), np.float32)
    for ci in range(cp):
        Wsl[ci * C:(ci + 1) * C, :] = lin_w
    b_fold = (np.asarray(params['flat_b'], np.float32) @ lin_w
              + np.asarray(params['lin_b'], np.float32)).reshape(1, C)
    head = dict(hwf=HWf, cp=cp, c=C, kcols=cp * C,
                wbig_off=add_w(Wbig), wsl_off=add_w(Wsl),
                dm_off=add_m(Dm), bf_off=add_m(b_fold))

    wslab = jnp.asarray(np.concatenate(wparts, axis=0), dtype=MM_DTYPE)
    bslab = jnp.asarray(np.stack(bparts, axis=1), dtype=jnp.float32)
    mslab = jnp.asarray(np.concatenate(mparts, axis=0), dtype=jnp.float32)
    kmeta = dict(input=inm, blocks=tuple(kblocks), head=head)
    return kmeta, wslab, bslab, mslab


# --------------------------------------------------------------------------
# Wrapper: one pallas_call for the whole forward pass
# --------------------------------------------------------------------------
def forward(kmeta, wslab, bslab, mslab, emb, img_nchw, c):
    B, cimg, H0, W0 = img_nchw.shape
    # NCHW -> (B, C, H*W): channels on sublanes, spatial on lanes (pure reshape).
    x = img_nchw.reshape(B, cimg, H0 * W0).astype(jnp.float32)
    C = emb.shape[1]
    cemb = emb[c].reshape(B, 1, C).astype(jnp.float32)   # embedding gather (glue)

    out = pl.pallas_call(
        _make_kernel(kmeta),
        out_shape=jax.ShapeDtypeStruct((B, 1, 1), jnp.float32),
        grid=(B,),
        in_specs=[
            pl.BlockSpec((1, cimg, H0 * W0), lambda b: (b, 0, 0)),
            pl.BlockSpec((1, 1, C), lambda b: (b, 0, 0)),
            pl.BlockSpec(wslab.shape, lambda b: (0, 0)),   # constant slabs:
            pl.BlockSpec(bslab.shape, lambda b: (0, 0)),   # DMA'd once, shared
            pl.BlockSpec(mslab.shape, lambda b: (0, 0)),   # across grid steps
        ],
        out_specs=pl.BlockSpec((1, 1, 1), lambda b: (b, 0, 0)),
        compiler_params=pltpu.CompilerParams(
            dimension_semantics=("parallel",)),
    )(x, cemb, wslab, bslab, mslab)
    return out.reshape(B, 1)


# --------------------------------------------------------------------------
# Synthetic parameters (deterministic, fan-in scaled) + static plan
# --------------------------------------------------------------------------
def build_model(key, img_resolution=16, img_channels=3, base_channels=0,
                num_classes=10):
    num_resolutions = int(np.log2(img_resolution)) - 1
    flag = base_channels < 1
    if flag:
        base_channels = 4

    keys = iter(jax.random.split(key, 256))

    def winit(shape, fan_in):
        return (jax.random.normal(next(keys), shape)
                / np.sqrt(fan_in)).astype(jnp.float32)

    params = {'in_w': winit((img_channels, base_channels), img_channels),
              'in_b': winit((base_channels,), img_channels)}

    plan, blocks = [], []
    H = W = img_resolution

    def add_block(cin, cout, downsample):
        nonlocal H, W
        has_proj = cin != cout                    # 1x1 shortcut conv iff cin != cout
        blk = dict(H=H, W=W, cin=cin, cout=cout, has_proj=has_proj,
                   downsample=downsample,
                   Hout=H // 2 if downsample else H,
                   Wout=W // 2 if downsample else W)
        bw = dict(w3=winit((3, 3, cin, cout), 9 * cin),             # HWIO
                  b3=winit((cout,), 9 * cin),
                  wp=winit((cin, cout), cin) if has_proj else None,
                  bp=winit((cout,), cin) if has_proj else None)
        plan.append(blk)
        blocks.append(bw)
        H, W = blk['Hout'], blk['Wout']

    cur = base_channels
    nxt = cur
    for _ in range(1, num_resolutions):
        if flag:
            nxt = cur * 2
        add_block(cur, nxt, downsample=False)
        add_block(nxt, nxt, downsample=True)
        cur = nxt
    add_block(cur, cur, downsample=False)
    add_block(cur, cur, downsample=False)
    assert H == 4 and W == 4, "flatten_conv expects a 4x4 final feature map"

    params['blocks'] = blocks
    params['flat_w'] = winit((4, 4, cur, cur), 16 * cur)            # HWIO
    params['flat_b'] = winit((cur,), 16 * cur)
    params['lin_w'] = winit((cur, cur), cur)                        # (in, out)
    params['lin_b'] = winit((cur,), cur)
    params['emb'] = jax.random.normal(next(keys),
                                      (num_classes, cur)).astype(jnp.float32)
    return tuple(plan), params


# --------------------------------------------------------------------------
# Pure-JAX reference. mm_dtype=bf16 emulates the kernel's MXU operand rounding
# (f32 accumulation); mm_dtype=None is the exact f32 PyTorch-equivalent math.
# --------------------------------------------------------------------------
def reference_forward(plan, params, img_nchw, c, mm_dtype=None):
    if mm_dtype is None:
        q = lambda t: t
    else:
        q = lambda t: t.astype(mm_dtype).astype(jnp.float32)
    hi = lax.Precision.HIGHEST

    def conv(x, w, b, padding):
        return lax.conv_general_dilated(
            q(x), q(w), (1, 1), padding,
            dimension_numbers=('NHWC', 'HWIO', 'NHWC'), precision=hi) + b

    def avgpool2x2(x):              # == bilinear 0.5x, align_corners=False
        B, H, W, C = x.shape
        return q(x).reshape(B, H // 2, 2, W // 2, 2, C).mean(axis=(2, 4))

    x = jnp.transpose(img_nchw, (0, 2, 3, 1)).astype(jnp.float32)
    x = conv(x, params['in_w'][None, None], params['in_b'], 'VALID')
    for blk, bw in zip(plan, params['blocks']):
        r = conv(x, bw['w3'], bw['b3'], 'SAME')
        r = jnp.maximum(r, 0.2 * r)
        s = x if not blk['has_proj'] else conv(x, bw['wp'][None, None],
                                               bw['bp'], 'VALID')
        y = r + s
        if blk['downsample']:
            y = avgpool2x2(y)
        x = y
    B, H, W, C = x.shape
    z = jnp.dot(q(x.reshape(B, H * W * C)),
                q(params['flat_w'].reshape(H * W * C, C)),
                precision=hi) + params['flat_b']
    feat = jnp.dot(q(z), q(params['lin_w']), precision=hi) + params['lin_b']
    return jnp.sum(params['emb'][c] * feat, axis=1, keepdims=True)


# --------------------------------------------------------------------------
if __name__ == "__main__":
    key = jax.random.PRNGKey(0)
    pkey, ikey, ckey = jax.random.split(key, 3)

    # img_resolution=16, img_channels=3, base_channels=0 (-> 4, doubling path),
    # num_classes=10  =>  num_resolutions = 3, six residual blocks.
    plan, params = build_model(pkey, img_resolution=16, img_channels=3,
                               base_channels=0, num_classes=10)
    kmeta, wslab, bslab, mslab = pack_model(plan, params)

    img = jax.random.normal(ikey, (2, 3, 16, 16), jnp.float32)   # NCHW like PyTorch
    c = jax.random.randint(ckey, (2,), 0, 10)

    fwd = jax.jit(functools.partial(forward, kmeta))
    out = jax.block_until_ready(fwd(wslab, bslab, mslab, params['emb'], img, c))
    assert out.shape == (2, 1)

    # Structural check vs. a reference with matmul operands rounded to bf16
    # (what the MXU sees).  The kernel folds the head biases / Linear layer, so
    # intermediate roundings differ slightly -> scale-relative tolerance.
    ref_bf16 = reference_forward(plan, params, img, c, mm_dtype=MM_DTYPE)
    scale_b = float(jnp.max(jnp.abs(ref_bf16)))
    np.testing.assert_allclose(np.asarray(out), np.asarray(ref_bf16),
                               rtol=3e-2, atol=3e-2 * max(scale_b, 1.0))

    # Fidelity check vs. the exact f32 (PyTorch-semantics) reference; bf16 MXU
    # operand quantization is the only deviation.
    ref_f32 = reference_forward(plan, params, img, c, mm_dtype=None)
    scale = float(jnp.max(jnp.abs(ref_f32)))
    np.testing.assert_allclose(np.asarray(out), np.asarray(ref_f32),
                               rtol=0.1, atol=0.1 * max(scale, 1.0))
    print("KERNEL_OK")
</pallas_src>

<mosaic_0001>
module attributes {stable_mosaic.version = 11 : i64} {
  func.func @kernel(%arg0: i32, %arg1: memref<1x3x256xf32, #tpu.memory_space<vmem>>, %arg2: memref<1x1x16xf32, #tpu.memory_space<vmem>>, %arg3: memref<704x256xbf16, #tpu.memory_space<vmem>>, %arg4: memref<16x9xf32, #tpu.memory_space<vmem>>, %arg5: memref<48x256xf32, #tpu.memory_space<vmem>>, %arg6: memref<1x1x1xf32, #tpu.memory_space<vmem>>) attributes {dimension_semantics = [#tpu.dimension_semantics<parallel>], iteration_bounds = array<i64: 2>, scalar_prefetch = 0 : i64, scratch_operands = 0 : i64, tpu.core_type = #tpu.core_type<tc>, window_params = [{transform_indices = @transform_0, window_bounds = array<i64: 1, 3, 256>}, {transform_indices = @transform_1, window_bounds = array<i64: 1, 1, 16>}, {pipeline_mode = #tpu.pipeline_mode<synchronous>, transform_indices = @transform_2, window_bounds = array<i64: 704, 256>}, {pipeline_mode = #tpu.pipeline_mode<synchronous>, transform_indices = @transform_3, window_bounds = array<i64: 16, 9>}, {pipeline_mode = #tpu.pipeline_mode<synchronous>, transform_indices = @transform_4, window_bounds = array<i64: 48, 256>}, {transform_indices = @transform_5, window_bounds = array<i64: 1, 1, 1>}]} {
    %c0 = arith.constant 0 : index
    %c0_0 = arith.constant 0 : index
    %c0_1 = arith.constant 0 : index
    %0 = vector.load %arg1[%c0, %c0_0, %c0_1] : memref<1x3x256xf32, #tpu.memory_space<vmem>>, vector<1x3x256xf32>
    %1 = vector.shape_cast %0 : vector<1x3x256xf32> to vector<3x256xf32>
    %2 = arith.truncf %1 : vector<3x256xf32> to vector<3x256xbf16>
    %c0_2 = arith.constant 0 : index
    %c0_3 = arith.constant 0 : index
    %3 = vector.load %arg3[%c0_2, %c0_3] : memref<704x256xbf16, #tpu.memory_space<vmem>>, vector<8x3xbf16>
    %cst = arith.constant dense<0.000000e+00> : vector<8x256xf32>
    %4 = tpu.matmul %3, %2, %cst {dimension_numbers = #tpu.dot_dimension_numbers<[1], [0], [0], [1], [0, 0, 1, 1], [], []>} : vector<8x3xbf16>, vector<3x256xbf16>, vector<8x256xf32> -> vector<8x256xf32>
    %c0_4 = arith.constant 0 : index
    %c0_5 = arith.constant 0 : index
    %5 = vector.load %arg4[%c0_4, %c0_5] : memref<16x9xf32, #tpu.memory_space<vmem>>, vector<8x1xf32>
    %6 = vector.broadcast %5 : vector<8x1xf32> to vector<8x256xf32>
    %7 = arith.addf %4, %6 : vector<8x256xf32>
    %c17_i32 = arith.constant 17 : i32
    %8 = tpu.dynamic_rotate %7 by %c17_i32 dim 1 : vector<8x256xf32>, i32 -> vector<8x256xf32>
    %c0_6 = arith.constant 0 : index
    %c0_7 = arith.constant 0 : index
    %9 = vector.load %arg5[%c0_6, %c0_7] : memref<48x256xf32, #tpu.memory_space<vmem>>, vector<1x256xf32>
    %10 = vector.broadcast %9 : vector<1x256xf32> to vector<8x256xf32>
    %11 = arith.mulf %8, %10 : vector<8x256xf32>
    %c16_i32 = arith.constant 16 : i32
    %12 = tpu.dynamic_rotate %7 by %c16_i32 dim 1 : vector<8x256xf32>, i32 -> vector<8x256xf32>
    %c1 = arith.constant 1 : index
    %c0_8 = arith.constant 0 : index
    %13 = vector.load %arg5[%c1, %c0_8] : memref<48x256xf32, #tpu.memory_space<vmem>>, vector<1x256xf32>
    %14 = vector.broadcast %13 : vector<1x256xf32> to vector<8x256xf32>
    %15 = arith.mulf %12, %14 : vector<8x256xf32>
    %c15_i32 = arith.constant 15 : i32
    %16 = tpu.dynamic_rotate %7 by %c15_i32 dim 1 : vector<8x256xf32>, i32 -> vector<8x256xf32>
    %c2 = arith.constant 2 : index
    %c0_9 = arith.constant 0 : index
    %17 = vector.load %arg5[%c2, %c0_9] : memref<48x256xf32, #tpu.memory_space<vmem>>, vector<1x256xf32>
    %18 = vector.broadcast %17 : vector<1x256xf32> to vector<8x256xf32>
    %19 = arith.mulf %16, %18 : vector<8x256xf32>
    %c1_i32 = arith.constant 1 : i32
    %20 = tpu.dynamic_rotate %7 by %c1_i32 dim 1 : vector<8x256xf32>, i32 -> vector<8x256xf32>
    %c3 = arith.constant 3 : index
    %c0_10 = arith.constant 0 : index
    %21 = vector.load %arg5[%c3, %c0_10] : memref<48x256xf32, #tpu.memory_space<vmem>>, vector<1x256xf32>
    %22 = vector.broadcast %21 : vector<1x256xf32> to vector<8x256xf32>
    %23 = arith.mulf %20, %22 : vector<8x256xf32>
    %c255_i32 = arith.constant 255 : i32
    %24 = tpu.dynamic_rotate %7 by %c255_i32 dim 1 : vector<8x256xf32>, i32 -> vector<8x256xf32>
    %c4 = arith.constant 4 : index
    %c0_11 = arith.constant 0 : index
    %25 = vector.load %arg5[%c4, %c0_11] : memref<48x256xf32, #tpu.memory_space<vmem>>, vector<1x256xf32>
    %26 = vector.broadcast %25 : vector<1x256xf32> to vector<8x256xf32>
    %27 = arith.mulf %24, %26 : vector<8x256xf32>
    %c241_i32 = arith.constant 241 : i32
    %28 = tpu.dynamic_rotate %7 by %c241_i32 dim 1 : vector<8x256xf32>, i32 -> vector<8x256xf32>
    %c5 = arith.constant 5 : index
    %c0_12 = arith.constant 0 : index
    %29 = vector.load %arg5[%c5, %c0_12] : memref<48x256xf32, #tpu.memory_space<vmem>>, vector<1x256xf32>
    %30 = vector.broadcast %29 : vector<1x256xf32> to vector<8x256xf32>
    %31 = arith.mulf %28, %30 : vector<8x256xf32>
    %c240_i32 = arith.constant 240 : i32
    %32 = tpu.dynamic_rotate %7 by %c240_i32 dim 1 : vector<8x256xf32>, i32 -> vector<8x256xf32>
    %c6 = arith.constant 6 : index
    %c0_13 = arith.constant 0 : index
    %33 = vector.load %arg5[%c6, %c0_13] : memref<48x256xf32, #tpu.memory_space<vmem>>, vector<1x256xf32>
    %34 = vector.broadcast %33 : vector<1x256xf32> to vector<8x256xf32>
    %35 = arith.mulf %32, %34 : vector<8x256xf32>
    %c239_i32 = arith.constant 239 : i32
    %36 = tpu.dynamic_rotate %7 by %c239_i32 dim 1 : vector<8x256xf32>, i32 -> vector<8x256xf32>
    %c7 = arith.constant 7 : index
    %c0_14 = arith.constant 0 : index
    %37 = vector.load %arg5[%c7, %c0_14] : memref<48x256xf32, #tpu.memory_space<vmem>>, vector<1x256xf32>
    %38 = vector.broadcast %37 : vector<1x256xf32> to vector<8x256xf32>
    %39 = arith.mulf %36, %38 : vector<8x256xf32>
    %40 = tpu.concatenate %11, %15, %19, %23, %7, %27, %31, %35, %39 in 0 : vector<8x256xf32>, vector<8x256xf32>, vector<8x256xf32>, vector<8x256xf32>, vector<8x256xf32>, vector<8x256xf32>, vector<8x256xf32>, vector<8x256xf32>, vector<8x256xf32> -> vector<72x256xf32>
    %41 = arith.truncf %40 : vector<72x256xf32> to vector<72x256xbf16>
    %c8 = arith.constant 8 : index
    %c0_15 = arith.constant 0 : index
    %42 = vector.load %arg3[%c8, %c0_15] : memref<704x256xbf16, #tpu.memory_space<vmem>>, vector<16x72xbf16>
    %cst_16 = arith.constant dense<0.000000e+00> : vector<16x256xf32>
    %43 = tpu.matmul %42, %41, %cst_16 {dimension_numbers = #tpu.dot_dimension_numbers<[1], [0], [0], [1], [0, 0, 1, 1], [], []>} : vector<16x72xbf16>, vector<72x256xbf16>, vector<16x256xf32> -> vector<16x256xf32>
    %c0_17 = arith.constant 0 : index
    %c1_18 = arith.constant 1 : index
    %44 = vector.load %arg4[%c0_17, %c1_18] : memref<16x9xf32, #tpu.memory_space<vmem>>, vector<8x1xf32>
    %45 = vector.extract_strided_slice %43 {offsets = [0, 0], sizes = [8, 256], strides = [1, 1]} : vector<16x256xf32> to vector<8x256xf32>
    %46 = vector.broadcast %44 : vector<8x1xf32> to vector<8x256xf32>
    %47 = arith.addf %45, %46 : vector<8x256xf32>
    %48 = vector.extract_strided_slice %43 {offsets = [8, 0], sizes = [8, 256], strides = [1, 1]} : vector<16x256xf32> to vector<8x256xf32>
    %c0_19 = arith.constant 0 : index
    %c2_20 = arith.constant 2 : index
    %49 = vector.load %arg4[%c0_19, %c2_20] : memref<16x9xf32, #tpu.memory_space<vmem>>, vector<8x1xf32>
    %50 = vector.broadcast %49 : vector<8x1xf32> to vector<8x256xf32>
    %51 = arith.addf %48, %50 : vector<8x256xf32>
    %cst_21 = arith.constant 2.000000e-01 : f32
    %52 = vector.broadcast %cst_21 : f32 to vector<8x256xf32>
    %53 = arith.mulf %52, %47 : vector<8x256xf32>
    %54 = arith.maximumf %47, %53 : vector<8x256xf32>
    %55 = arith.addf %54, %51 : vector<8x256xf32>
    %c17_i32_22 = arith.constant 17 : i32
    %56 = tpu.dynamic_rotate %55 by %c17_i32_22 dim 1 : vector<8x256xf32>, i32 -> vector<8x256xf32>
    %c0_23 = arith.constant 0 : index
    %c0_24 = arith.constant 0 : index
    %57 = vector.load %arg5[%c0_23, %c0_24] : memref<48x256xf32, #tpu.memory_space<vmem>>, vector<1x256xf32>
    %58 = vector.broadcast %57 : vector<1x256xf32> to vector<8x256xf32>
    %59 = arith.mulf %56, %58 : vector<8x256xf32>
    %c16_i32_25 = arith.constant 16 : i32
    %60 = tpu.dynamic_rotate %55 by %c16_i32_25 dim 1 : vector<8x256xf32>, i32 -> vector<8x256xf32>
    %c1_26 = arith.constant 1 : index
    %c0_27 = arith.constant 0 : index
    %61 = vector.load %arg5[%c1_26, %c0_27] : memref<48x256xf32, #tpu.memory_space<vmem>>, vector<1x256xf32>
    %62 = vector.broadcast %61 : vector<1x256xf32> to vector<8x256xf32>
    %63 = arith.mulf %60, %62 : vector<8x256xf32>
    %c15_i32_28 = arith.constant 15 : i32
    %64 = tpu.dynamic_rotate %55 by %c15_i32_28 dim 1 : vector<8x256xf32>, i32 -> vector<8x256xf32>
    %c2_29 = arith.constant 2 : index
    %c0_30 = arith.constant 0 : index
    %65 = vector.load %arg5[%c2_29, %c0_30] : memref<48x256xf32, #tpu.memory_space<vmem>>, vector<1x256xf32>
    %66 = vector.broadcast %65 : vector<1x256xf32> to vector<8x256xf32>
    %67 = arith.mulf %64, %66 : vector<8x256xf32>
    %c1_i32_31 = arith.constant 1 : i32
    %68 = tpu.dynamic_rotate %55 by %c1_i32_31 dim 1 : vector<8x256xf32>, i32 -> vector<8x256xf32>
    %c3_32 = arith.constant 3 : index
    %c0_33 = arith.constant 0 : index
    %69 = vector.load %arg5[%c3_32, %c0_33] : memref<48x256xf32, #tpu.memory_space<vmem>>, vector<1x256xf32>
    %70 = vector.broadcast %69 : vector<1x256xf32> to vector<8x256xf32>
    %71 = arith.mulf %68, %70 : vector<8x256xf32>
    %c255_i32_34 = arith.constant 255 : i32
    %72 = tpu.dynamic_rotate %55 by %c255_i32_34 dim 1 : vector<8x256xf32>, i32 -> vector<8x256xf32>
    %c4_35 = arith.constant 4 : index
    %c0_36 = arith.constant 0 : index
    %73 = vector.load %arg5[%c4_35, %c0_36] : memref<48x256xf32, #tpu.memory_space<vmem>>, vector<1x256xf32>
    %74 = vector.broadcast %73 : vector<1x256xf32> to vector<8x256xf32>
    %75 = arith.mulf %72, %74 : vector<8x256xf32>
    %c241_i32_37 = arith.constant 241 : i32
    %76 = tpu.dynamic_rotate %55 by %c241_i32_37 dim 1 : vector<8x256xf32>, i32 -> vector<8x256xf32>
    %c5_38 = arith.constant 5 : index
    %c0_39 = arith.constant 0 : index
    %77 = vector.load %arg5[%c5_38, %c0_39] : memref<48x256xf32, #tpu.memory_space<vmem>>, vector<1x256xf32>
    %78 = vector.broadcast %77 : vector<1x256xf32> to vector<8x256xf32>
    %79 = arith.mulf %76, %78 : vector<8x256xf32>
    %c240_i32_40 = arith.constant 240 : i32
    %80 = tpu.dynamic_rotate %55 by %c240_i32_40 dim 1 : vector<8x256xf32>, i32 -> vector<8x256xf32>
    %c6_41 = arith.constant 6 : index
    %c0_42 = arith.constant 0 : index
    %81 = vector.load %arg5[%c6_41, %c0_42] : memref<48x256xf32, #tpu.memory_space<vmem>>, vector<1x256xf32>
    %82 = vector.broadcast %81 : vector<1x256xf32> to vector<8x256xf32>
    %83 = arith.mulf %80, %82 : vector<8x256xf32>
    %c239_i32_43 = arith.constant 239 : i32
    %84 = tpu.dynamic_rotate %55 by %c239_i32_43 dim 1 : vector<8x256xf32>, i32 -> vector<8x256xf32>
    %c7_44 = arith.constant 7 : index
    %c0_45 = arith.constant 0 : index
    %85 = vector.load %arg5[%c7_44, %c0_45] : memref<48x256xf32, #tpu.memory_space<vmem>>, vector<1x256xf32>
    %86 = vector.broadcast %85 : vector<1x256xf32> to vector<8x256xf32>
    %87 = arith.mulf %84, %86 : vector<8x256xf32>
    %88 = tpu.concatenate %59, %63, %67, %71, %55, %75, %79, %83, %87 in 0 : vector<8x256xf32>, vector<8x256xf32>, vector<8x256xf32>, vector<8x256xf32>, vector<8x256xf32>, vector<8x256xf32>, vector<8x256xf32>, vector<8x256xf32>, vector<8x256xf32> -> vector<72x256xf32>
    %89 = arith.truncf %88 : vector<72x256xf32> to vector<72x256xbf16>
    %c24 = arith.constant 24 : index
    %c0_46 = arith.constant 0 : index
    %90 = vector.load %arg3[%c24, %c0_46] : memref<704x256xbf16, #tpu.memory_space<vmem>>, vector<8x72xbf16>
    %cst_47 = arith.constant dense<0.000000e+00> : vector<8x256xf32>
    %91 = tpu.matmul %90, %89, %cst_47 {dimension_numbers = #tpu.dot_dimension_numbers<[1], [0], [0], [1], [0, 0, 1, 1], [], []>} : vector<8x72xbf16>, vector<72x256xbf16>, vector<8x256xf32> -> vector<8x256xf32>
    %c0_48 = arith.constant 0 : index
    %c3_49 = arith.constant 3 : index
    %92 = vector.load %arg4[%c0_48, %c3_49] : memref<16x9xf32, #tpu.memory_space<vmem>>, vector<8x1xf32>
    %93 = vector.broadcast %92 : vector<8x1xf32> to vector<8x256xf32>
    %94 = arith.addf %91, %93 : vector<8x256xf32>
    %cst_50 = arith.constant 2.000000e-01 : f32
    %95 = vector.broadcast %cst_50 : f32 to vector<8x256xf32>
    %96 = arith.mulf %95, %94 : vector<8x256xf32>
    %97 = arith.maximumf %94, %96 : vector<8x256xf32>
    %98 = arith.addf %97, %55 : vector<8x256xf32>
    %c32 = arith.constant 32 : index
    %c0_51 = arith.constant 0 : index
    %99 = vector.load %arg3[%c32, %c0_51] : memref<704x256xbf16, #tpu.memory_space<vmem>>, vector<256x64xbf16>
    %100 = arith.truncf %98 : vector<8x256xf32> to vector<8x256xbf16>
    %cst_52 = arith.constant dense<0.000000e+00> : vector<8x64xf32>
    %101 = tpu.matmul %100, %99, %cst_52 {dimension_numbers = #tpu.dot_dimension_numbers<[1], [0], [0], [1], [0, 0, 1, 1], [], []>} : vector<8x256xbf16>, vector<256x64xbf16>, vector<8x64xf32> -> vector<8x64xf32>
    %c9_i32 = arith.constant 9 : i32
    %102 = tpu.dynamic_rotate %101 by %c9_i32 dim 1 : vector<8x64xf32>, i32 -> vector<8x64xf32>
    %c8_53 = arith.constant 8 : index
    %c0_54 = arith.constant 0 : index
    %103 = vector.load %arg5[%c8_53, %c0_54] : memref<48x256xf32, #tpu.memory_space<vmem>>, vector<1x64xf32>
    %104 = vector.broadcast %103 : vector<1x64xf32> to vector<8x64xf32>
    %105 = arith.mulf %102, %104 : vector<8x64xf32>
    %c8_i32 = arith.constant 8 : i32
    %106 = tpu.dynamic_rotate %101 by %c8_i32 dim 1 : vector<8x64xf32>, i32 -> vector<8x64xf32>
    %c9 = arith.constant 9 : index
    %c0_55 = arith.constant 0 : index
    %107 = vector.load %arg5[%c9, %c0_55] : memref<48x256xf32, #tpu.memory_space<vmem>>, vector<1x64xf32>
    %108 = vector.broadcast %107 : vector<1x64xf32> to vector<8x64xf32>
    %109 = arith.mulf %106, %108 : vector<8x64xf32>
    %c7_i32 = arith.constant 7 : i32
    %110 = tpu.dynamic_rotate %101 by %c7_i32 dim 1 : vector<8x64xf32>, i32 -> vector<8x64xf32>
    %c10 = arith.constant 10 : index
    %c0_56 = arith.constant 0 : index
    %111 = vector.load %arg5[%c10, %c0_56] : memref<48x256xf32, #tpu.memory_space<vmem>>, vector<1x64xf32>
    %112 = vector.broadcast %111 : vector<1x64xf32> to vector<8x64xf32>
    %113 = arith.mulf %110, %112 : vector<8x64xf32>
    %c1_i32_57 = arith.constant 1 : i32
    %114 = tpu.dynamic_rotate %101 by %c1_i32_57 dim 1 : vector<8x64xf32>, i32 -> vector<8x64xf32>
    %c11 = arith.constant 11 : index
    %c0_58 = arith.constant 0 : index
    %115 = vector.load %arg5[%c11, %c0_58] : memref<48x256xf32, #tpu.memory_space<vmem>>, vector<1x64xf32>
    %116 = vector.broadcast %115 : vector<1x64xf32> to vector<8x64xf32>
    %117 = arith.mulf %114, %116 : vector<8x64xf32>
    %c63_i32 = arith.constant 63 : i32
    %118 = tpu.dynamic_rotate %101 by %c63_i32 dim 1 : vector<8x64xf32>, i32 -> vector<8x64xf32>
    %c12 = arith.constant 12 : index
    %c0_59 = arith.constant 0 : index
    %119 = vector.load %arg5[%c12, %c0_59] : memref<48x256xf32, #tpu.memory_space<vmem>>, vector<1x64xf32>
    %120 = vector.broadcast %119 : vector<1x64xf32> to vector<8x64xf32>
    %121 = arith.mulf %118, %120 : vector<8x64xf32>
    %c57_i32 = arith.constant 57 : i32
    %122 = tpu.dynamic_rotate %101 by %c57_i32 dim 1 : vector<8x64xf32>, i32 -> vector<8x64xf32>
    %c13 = arith.constant 13 : index
    %c0_60 = arith.constant 0 : index
    %123 = vector.load %arg5[%c13, %c0_60] : memref<48x256xf32, #tpu.memory_space<vmem>>, vector<1x64xf32>
    %124 = vector.broadcast %123 : vector<1x64xf32> to vector<8x64xf32>
    %125 = arith.mulf %122, %124 : vector<8x64xf32>
    %c56_i32 = arith.constant 56 : i32
    %126 = tpu.dynamic_rotate %101 by %c56_i32 dim 1 : vector<8x64xf32>, i32 -> vector<8x64xf32>
    %c14 = arith.constant 14 : index
    %c0_61 = arith.constant 0 : index
    %127 = vector.load %arg5[%c14, %c0_61] : memref<48x256xf32, #tpu.memory_space<vmem>>, vector<1x64xf32>
    %128 = vector.broadcast %127 : vector<1x64xf32> to vector<8x64xf32>
    %129 = arith.mulf %126, %128 : vector<8x64xf32>
    %c55_i32 = arith.constant 55 : i32
    %130 = tpu.dynamic_rotate %101 by %c55_i32 dim 1 : vector<8x64xf32>, i32 -> vector<8x64xf32>
    %c15 = arith.constant 15 : index
    %c0_62 = arith.constant 0 : index
    %131 = vector.load %arg5[%c15, %c0_62] : memref<48x256xf32, #tpu.memory_space<vmem>>, vector<1x64xf32>
    %132 = vector.broadcast %131 : vector<1x64xf32> to vector<8x64xf32>
    %133 = arith.mulf %130, %132 : vector<8x64xf32>
    %134 = tpu.concatenate %105, %109, %113, %117, %101, %121, %125, %129, %133 in 0 : vector<8x64xf32>, vector<8x64xf32>, vector<8x64xf32>, vector<8x64xf32>, vector<8x64xf32>, vector<8x64xf32>, vector<8x64xf32>, vector<8x64xf32>, vector<8x64xf32> -> vector<72x64xf32>
    %135 = arith.truncf %134 : vector<72x64xf32> to vector<72x64xbf16>
    %c288 = arith.constant 288 : index
    %c0_63 = arith.constant 0 : index
    %136 = vector.load %arg3[%c288, %c0_63] : memref<704x256xbf16, #tpu.memory_space<vmem>>, vector<32x72xbf16>
    %cst_64 = arith.constant dense<0.000000e+00> : vector<32x64xf32>
    %137 = tpu.matmul %136, %135, %cst_64 {dimension_numbers = #tpu.dot_dimension_numbers<[1], [0], [0], [1], [0, 0, 1, 1], [], []>} : vector<32x72xbf16>, vector<72x64xbf16>, vector<32x64xf32> -> vector<32x64xf32>
    %c0_65 = arith.constant 0 : index
    %c4_66 = arith.constant 4 : index
    %138 = vector.load %arg4[%c0_65, %c4_66] : memref<16x9xf32, #tpu.memory_space<vmem>>, vector<16x1xf32>
    %139 = vector.extract_strided_slice %137 {offsets = [0, 0], sizes = [16, 64], strides = [1, 1]} : vector<32x64xf32> to vector<16x64xf32>
    %140 = vector.broadcast %138 : vector<16x1xf32> to vector<16x64xf32>
    %141 = arith.addf %139, %140 : vector<16x64xf32>
    %142 = vector.extract_strided_slice %137 {offsets = [16, 0], sizes = [16, 64], strides = [1, 1]} : vector<32x64xf32> to vector<16x64xf32>
    %c0_67 = arith.constant 0 : index
    %c5_68 = arith.constant 5 : index
    %143 = vector.load %arg4[%c0_67, %c5_68] : memref<16x9xf32, #tpu.memory_space<vmem>>, vector<16x1xf32>
    %144 = vector.broadcast %143 : vector<16x1xf32> to vector<16x64xf32>
    %145 = arith.addf %142, %144 : vector<16x64xf32>
    %cst_69 = arith.constant 2.000000e-01 : f32
    %146 = vector.broadcast %cst_69 : f32 to vector<16x64xf32>
    %147 = arith.mulf %146, %141 : vector<16x64xf32>
    %148 = arith.maximumf %141, %147 : vector<16x64xf32>
    %149 = arith.addf %148, %145 : vector<16x64xf32>
    %c9_i32_70 = arith.constant 9 : i32
    %150 = tpu.dynamic_rotate %149 by %c9_i32_70 dim 1 : vector<16x64xf32>, i32 -> vector<16x64xf32>
    %c8_71 = arith.constant 8 : index
    %c0_72 = arith.constant 0 : index
    %151 = vector.load %arg5[%c8_71, %c0_72] : memref<48x256xf32, #tpu.memory_space<vmem>>, vector<1x64xf32>
    %152 = vector.broadcast %151 : vector<1x64xf32> to vector<16x64xf32>
    %153 = arith.mulf %150, %152 : vector<16x64xf32>
    %c8_i32_73 = arith.constant 8 : i32
    %154 = tpu.dynamic_rotate %149 by %c8_i32_73 dim 1 : vector<16x64xf32>, i32 -> vector<16x64xf32>
    %c9_74 = arith.constant 9 : index
    %c0_75 = arith.constant 0 : index
    %155 = vector.load %arg5[%c9_74, %c0_75] : memref<48x256xf32, #tpu.memory_space<vmem>>, vector<1x64xf32>
    %156 = vector.broadcast %155 : vector<1x64xf32> to vector<16x64xf32>
    %157 = arith.mulf %154, %156 : vector<16x64xf32>
    %c7_i32_76 = arith.constant 7 : i32
    %158 = tpu.dynamic_rotate %149 by %c7_i32_76 dim 1 : vector<16x64xf32>, i32 -> vector<16x64xf32>
    %c10_77 = arith.constant 10 : index
    %c0_78 = arith.constant 0 : index
    %159 = vector.load %arg5[%c10_77, %c0_78] : memref<48x256xf32, #tpu.memory_space<vmem>>, vector<1x64xf32>
    %160 = vector.broadcast %159 : vector<1x64xf32> to vector<16x64xf32>
    %161 = arith.mulf %158, %160 : vector<16x64xf32>
    %c1_i32_79 = arith.constant 1 : i32
    %162 = tpu.dynamic_rotate %149 by %c1_i32_79 dim 1 : vector<16x64xf32>, i32 -> vector<16x64xf32>
    %c11_80 = arith.constant 11 : index
    %c0_81 = arith.constant 0 : index
    %163 = vector.load %arg5[%c11_80, %c0_81] : memref<48x256xf32, #tpu.memory_space<vmem>>, vector<1x64xf32>
    %164 = vector.broadcast %163 : vector<1x64xf32> to vector<16x64xf32>
    %165 = arith.mulf %162, %164 : vector<16x64xf32>
    %c63_i32_82 = arith.constant 63 : i32
    %166 = tpu.dynamic_rotate %149 by %c63_i32_82 dim 1 : vector<16x64xf32>, i32 -> vector<16x64xf32>
    %c12_83 = arith.constant 12 : index
    %c0_84 = arith.constant 0 : index
    %167 = vector.load %arg5[%c12_83, %c0_84] : memref<48x256xf32, #tpu.memory_space<vmem>>, vector<1x64xf32>
    %168 = vector.broadcast %167 : vector<1x64xf32> to vector<16x64xf32>
    %169 = arith.mulf %166, %168 : vector<16x64xf32>
    %c57_i32_85 = arith.constant 57 : i32
    %170 = tpu.dynamic_rotate %149 by %c57_i32_85 dim 1 : vector<16x64xf32>, i32 -> vector<16x64xf32>
    %c13_86 = arith.constant 13 : index
    %c0_87 = arith.constant 0 : index
    %171 = vector.load %arg5[%c13_86, %c0_87] : memref<48x256xf32, #tpu.memory_space<vmem>>, vector<1x64xf32>
    %172 = vector.broadcast %171 : vector<1x64xf32> to vector<16x64xf32>
    %173 = arith.mulf %170, %172 : vector<16x64xf32>
    %c56_i32_88 = arith.constant 56 : i32
    %174 = tpu.dynamic_rotate %149 by %c56_i32_88 dim 1 : vector<16x64xf32>, i32 -> vector<16x64xf32>
    %c14_89 = arith.constant 14 : index
    %c0_90 = arith.constant 0 : index
    %175 = vector.load %arg5[%c14_89, %c0_90] : memref<48x256xf32, #tpu.memory_space<vmem>>, vector<1x64xf32>
    %176 = vector.broadcast %175 : vector<1x64xf32> to vector<16x64xf32>
    %177 = arith.mulf %174, %176 : vector<16x64xf32>
    %c55_i32_91 = arith.constant 55 : i32
    %178 = tpu.dynamic_rotate %149 by %c55_i32_91 dim 1 : vector<16x64xf32>, i32 -> vector<16x64xf32>
    %c15_92 = arith.constant 15 : index
    %c0_93 = arith.constant 0 : index
    %179 = vector.load %arg5[%c15_92, %c0_93] : memref<48x256xf32, #tpu.memory_space<vmem>>, vector<1x64xf32>
    %180 = vector.broadcast %179 : vector<1x64xf32> to vector<16x64xf32>
    %181 = arith.mulf %178, %180 : vector<16x64xf32>
    %182 = tpu.concatenate %153, %157, %161, %165, %149, %169, %173, %177, %181 in 0 : vector<16x64xf32>, vector<16x64xf32>, vector<16x64xf32>, vector<16x64xf32>, vector<16x64xf32>, vector<16x64xf32>, vector<16x64xf32>, vector<16x64xf32>, vector<16x64xf32> -> vector<144x64xf32>
    %183 = arith.truncf %182 : vector<144x64xf32> to vector<144x64xbf16>
    %c320 = arith.constant 320 : index
    %c0_94 = arith.constant 0 : index
    %184 = vector.load %arg3[%c320, %c0_94] : memref<704x256xbf16, #tpu.memory_space<vmem>>, vector<16x144xbf16>
    %cst_95 = arith.constant dense<0.000000e+00> : vector<16x64xf32>
    %185 = tpu.matmul %184, %183, %cst_95 {dimension_numbers = #tpu.dot_dimension_numbers<[1], [0], [0], [1], [0, 0, 1, 1], [], []>} : vector<16x144xbf16>, vector<144x64xbf16>, vector<16x64xf32> -> vector<16x64xf32>
    %c0_96 = arith.constant 0 : index
    %c6_97 = arith.constant 6 : index
    %186 = vector.load %arg4[%c0_96, %c6_97] : memref<16x9xf32, #tpu.memory_space<vmem>>, vector<16x1xf32>
    %187 = vector.broadcast %186 : vector<16x1xf32> to vector<16x64xf32>
    %188 = arith.addf %185, %187 : vector<16x64xf32>
    %cst_98 = arith.constant 2.000000e-01 : f32
    %189 = vector.broadcast %cst_98 : f32 to vector<16x64xf32>
    %190 = arith.mulf %189, %188 : vector<16x64xf32>
    %191 = arith.maximumf %188, %190 : vector<16x64xf32>
    %192 = arith.addf %191, %149 : vector<16x64xf32>
    %c336 = arith.constant 336 : index
    %c0_99 = arith.constant 0 : index
    %193 = vector.load %arg3[%c336, %c0_99] : memref<704x256xbf16, #tpu.memory_space<vmem>>, vector<64x16xbf16>
    %194 = arith.truncf %192 : vector<16x64xf32> to vector<16x64xbf16>
    %cst_100 = arith.constant dense<0.000000e+00> : vector<16x16xf32>
    %195 = tpu.matmul %194, %193, %cst_100 {dimension_numbers = #tpu.dot_dimension_numbers<[1], [0], [0], [1], [0, 0, 1, 1], [], []>} : vector<16x64xbf16>, vector<64x16xbf16>, vector<16x16xf32> -> vector<16x16xf32>
    %c5_i32 = arith.constant 5 : i32
    %196 = tpu.dynamic_rotate %195 by %c5_i32 dim 1 : vector<16x16xf32>, i32 -> vector<16x16xf32>
    %c16 = arith.constant 16 : index
    %c0_101 = arith.constant 0 : index
    %197 = vector.load %arg5[%c16, %c0_101] : memref<48x256xf32, #tpu.memory_space<vmem>>, vector<1x16xf32>
    %198 = vector.broadcast %197 : vector<1x16xf32> to vector<16x16xf32>
    %199 = arith.mulf %196, %198 : vector<16x16xf32>
    %c4_i32 = arith.constant 4 : i32
    %200 = tpu.dynamic_rotate %195 by %c4_i32 dim 1 : vector<16x16xf32>, i32 -> vector<16x16xf32>
    %c17 = arith.constant 17 : index
    %c0_102 = arith.constant 0 : index
    %201 = vector.load %arg5[%c17, %c0_102] : memref<48x256xf32, #tpu.memory_space<vmem>>, vector<1x16xf32>
    %202 = vector.broadcast %201 : vector<1x16xf32> to vector<16x16xf32>
    %203 = arith.mulf %200, %202 : vector<16x16xf32>
    %c3_i32 = arith.constant 3 : i32
    %204 = tpu.dynamic_rotate %195 by %c3_i32 dim 1 : vector<16x16xf32>, i32 -> vector<16x16xf32>
    %c18 = arith.constant 18 : index
    %c0_103 = arith.constant 0 : index
    %205 = vector.load %arg5[%c18, %c0_103] : memref<48x256xf32, #tpu.memory_space<vmem>>, vector<1x16xf32>
    %206 = vector.broadcast %205 : vector<1x16xf32> to vector<16x16xf32>
    %207 = arith.mulf %204, %206 : vector<16x16xf32>
    %c1_i32_104 = arith.constant 1 : i32
    %208 = tpu.dynamic_rotate %195 by %c1_i32_104 dim 1 : vector<16x16xf32>, i32 -> vector<16x16xf32>
    %c19 = arith.constant 19 : index
    %c0_105 = arith.constant 0 : index
    %209 = vector.load %arg5[%c19, %c0_105] : memref<48x256xf32, #tpu.memory_space<vmem>>, vector<1x16xf32>
    %210 = vector.broadcast %209 : vector<1x16xf32> to vector<16x16xf32>
    %211 = arith.mulf %208, %210 : vector<16x16xf32>
    %c15_i32_106 = arith.constant 15 : i32
    %212 = tpu.dynamic_rotate %195 by %c15_i32_106 dim 1 : vector<16x16xf32>, i32 -> vector<16x16xf32>
    %c20 = arith.constant 20 : index
    %c0_107 = arith.constant 0 : index
    %213 = vector.load %arg5[%c20, %c0_107] : memref<48x256xf32, #tpu.memory_space<vmem>>, vector<1x16xf32>
    %214 = vector.broadcast %213 : vector<1x16xf32> to vector<16x16xf32>
    %215 = arith.mulf %212, %214 : vector<16x16xf32>
    %c13_i32 = arith.constant 13 : i32
    %216 = tpu.dynamic_rotate %195 by %c13_i32 dim 1 : vector<16x16xf32>, i32 -> vector<16x16xf32>
    %c21 = arith.constant 21 : index
    %c0_108 = arith.constant 0 : index
    %217 = vector.load %arg5[%c21, %c0_108] : memref<48x256xf32, #tpu.memory_space<vmem>>, vector<1x16xf32>
    %218 = vector.broadcast %217 : vector<1x16xf32> to vector<16x16xf32>
    %219 = arith.mulf %216, %218 : vector<16x16xf32>
    %c12_i32 = arith.constant 12 : i32
    %220 = tpu.dynamic_rotate %195 by %c12_i32 dim 1 : vector<16x16xf32>, i32 -> vector<16x16xf32>
    %c22 = arith.constant 22 : index
    %c0_109 = arith.constant 0 : index
    %221 = vector.load %arg5[%c22, %c0_109] : memref<48x256xf32, #tpu.memory_space<vmem>>, vector<1x16xf32>
    %222 = vector.broadcast %221 : vector<1x16xf32> to vector<16x16xf32>
    %223 = arith.mulf %220, %222 : vector<16x16xf32>
    %c11_i32 = arith.constant 11 : i32
    %224 = tpu.dynamic_rotate %195 by %c11_i32 dim 1 : vector<16x16xf32>, i32 -> vector<16x16xf32>
    %c23 = arith.constant 23 : index
    %c0_110 = arith.constant 0 : index
    %225 = vector.load %arg5[%c23, %c0_110] : memref<48x256xf32, #tpu.memory_space<vmem>>, vector<1x16xf32>
    %226 = vector.broadcast %225 : vector<1x16xf32> to vector<16x16xf32>
    %227 = arith.mulf %224, %226 : vector<16x16xf32>
    %228 = tpu.concatenate %199, %203, %207, %211, %195, %215, %219, %223, %227 in 0 : vector<16x16xf32>, vector<16x16xf32>, vector<16x16xf32>, vector<16x16xf32>, vector<16x16xf32>, vector<16x16xf32>, vector<16x16xf32>, vector<16x16xf32>, vector<16x16xf32> -> vector<144x16xf32>
    %229 = arith.truncf %228 : vector<144x16xf32> to vector<144x16xbf16>
    %c400 = arith.constant 400 : index
    %c0_111 = arith.constant 0 : index
    %230 = vector.load %arg3[%c400, %c0_111] : memref<704x256xbf16, #tpu.memory_space<vmem>>, vector<16x144xbf16>
    %cst_112 = arith.constant dense<0.000000e+00> : vector<16x16xf32>
    %231 = tpu.matmul %230, %229, %cst_112 {dimension_numbers = #tpu.dot_dimension_numbers<[1], [0], [0], [1], [0, 0, 1, 1], [], []>} : vector<16x144xbf16>, vector<144x16xbf16>, vector<16x16xf32> -> vector<16x16xf32>
    %c0_113 = arith.constant 0 : index
    %c7_114 = arith.constant 7 : index
    %232 = vector.load %arg4[%c0_113, %c7_114] : memref<16x9xf32, #tpu.memory_space<vmem>>, vector<16x1xf32>
    %233 = vector.broadcast %232 : vector<16x1xf32> to vector<16x16xf32>
    %234 = arith.addf %231, %233 : vector<16x16xf32>
    %cst_115 = arith.constant 2.000000e-01 : f32
    %235 = vector.broadcast %cst_115 : f32 to vector<16x16xf32>
    %236 = arith.mulf %235, %234 : vector<16x16xf32>
    %237 = arith.maximumf %234, %236 : vector<16x16xf32>
    %238 = arith.addf %237, %195 : vector<16x16xf32>
    %c5_i32_116 = arith.constant 5 : i32
    %239 = tpu.dynamic_rotate %238 by %c5_i32_116 dim 1 : vector<16x16xf32>, i32 -> vector<16x16xf32>
    %c16_117 = arith.constant 16 : index
    %c0_118 = arith.constant 0 : index
    %240 = vector.load %arg5[%c16_117, %c0_118] : memref<48x256xf32, #tpu.memory_space<vmem>>, vector<1x16xf32>
    %241 = vector.broadcast %240 : vector<1x16xf32> to vector<16x16xf32>
    %242 = arith.mulf %239, %241 : vector<16x16xf32>
    %c4_i32_119 = arith.constant 4 : i32
    %243 = tpu.dynamic_rotate %238 by %c4_i32_119 dim 1 : vector<16x16xf32>, i32 -> vector<16x16xf32>
    %c17_120 = arith.constant 17 : index
    %c0_121 = arith.constant 0 : index
    %244 = vector.load %arg5[%c17_120, %c0_121] : memref<48x256xf32, #tpu.memory_space<vmem>>, vector<1x16xf32>
    %245 = vector.broadcast %244 : vector<1x16xf32> to vector<16x16xf32>
    %246 = arith.mulf %243, %245 : vector<16x16xf32>
    %c3_i32_122 = arith.constant 3 : i32
    %247 = tpu.dynamic_rotate %238 by %c3_i32_122 dim 1 : vector<16x16xf32>, i32 -> vector<16x16xf32>
    %c18_123 = arith.constant 18 : index
    %c0_124 = arith.constant 0 : index
    %248 = vector.load %arg5[%c18_123, %c0_124] : memref<48x256xf32, #tpu.memory_space<vmem>>, vector<1x16xf32>
    %249 = vector.broadcast %248 : vector<1x16xf32> to vector<16x16xf32>
    %250 = arith.mulf %247, %249 : vector<16x16xf32>
    %c1_i32_125 = arith.constant 1 : i32
    %251 = tpu.dynamic_rotate %238 by %c1_i32_125 dim 1 : vector<16x16xf32>, i32 -> vector<16x16xf32>
    %c19_126 = arith.constant 19 : index
    %c0_127 = arith.constant 0 : index
    %252 = vector.load %arg5[%c19_126, %c0_127] : memref<48x256xf32, #tpu.memory_space<vmem>>, vector<1x16xf32>
    %253 = vector.broadcast %252 : vector<1x16xf32> to vector<16x16xf32>
    %254 = arith.mulf %251, %253 : vector<16x16xf32>
    %c15_i32_128 = arith.constant 15 : i32
    %255 = tpu.dynamic_rotate %238 by %c15_i32_128 dim 1 : vector<16x16xf32>, i32 -> vector<16x16xf32>
    %c20_129 = arith.constant 20 : index
    %c0_130 = arith.constant 0 : index
    %256 = vector.load %arg5[%c20_129, %c0_130] : memref<48x256xf32, #tpu.memory_space<vmem>>, vector<1x16xf32>
    %257 = vector.broadcast %256 : vector<1x16xf32> to vector<16x16xf32>
    %258 = arith.mulf %255, %257 : vector<16x16xf32>
    %c13_i32_131 = arith.constant 13 : i32
    %259 = tpu.dynamic_rotate %238 by %c13_i32_131 dim 1 : vector<16x16xf32>, i32 -> vector<16x16xf32>
    %c21_132 = arith.constant 21 : index
    %c0_133 = arith.constant 0 : index
    %260 = vector.load %arg5[%c21_132, %c0_133] : memref<48x256xf32, #tpu.memory_space<vmem>>, vector<1x16xf32>
    %261 = vector.broadcast %260 : vector<1x16xf32> to vector<16x16xf32>
    %262 = arith.mulf %259, %261 : vector<16x16xf32>
    %c12_i32_134 = arith.constant 12 : i32
    %263 = tpu.dynamic_rotate %238 by %c12_i32_134 dim 1 : vector<16x16xf32>, i32 -> vector<16x16xf32>
    %c22_135 = arith.constant 22 : index
    %c0_136 = arith.constant 0 : index
    %264 = vector.load %arg5[%c22_135, %c0_136] : memref<48x256xf32, #tpu.memory_space<vmem>>, vector<1x16xf32>
    %265 = vector.broadcast %264 : vector<1x16xf32> to vector<16x16xf32>
    %266 = arith.mulf %263, %265 : vector<16x16xf32>
    %c11_i32_137 = arith.constant 11 : i32
    %267 = tpu.dynamic_rotate %238 by %c11_i32_137 dim 1 : vector<16x16xf32>, i32 -> vector<16x16xf32>
    %c23_138 = arith.constant 23 : index
    %c0_139 = arith.constant 0 : index
    %268 = vector.load %arg5[%c23_138, %c0_139] : memref<48x256xf32, #tpu.memory_space<vmem>>, vector<1x16xf32>
    %269 = vector.broadcast %268 : vector<1x16xf32> to vector<16x16xf32>
    %270 = arith.mulf %267, %269 : vector<16x16xf32>
    %271 = tpu.concatenate %242, %246, %250, %254, %238, %258, %262, %266, %270 in 0 : vector<16x16xf32>, vector<16x16xf32>, vector<16x16xf32>, vector<16x16xf32>, vector<16x16xf32>, vector<16x16xf32>, vector<16x16xf32>, vector<16x16xf32>, vector<16x16xf32> -> vector<144x16xf32>
    %272 = arith.truncf %271 : vector<144x16xf32> to vector<144x16xbf16>
    %c416 = arith.constant 416 : index
    %c0_140 = arith.constant 0 : index
    %273 = vector.load %arg3[%c416, %c0_140] : memref<704x256xbf16, #tpu.memory_space<vmem>>, vector<16x144xbf16>
    %cst_141 = arith.constant dense<0.000000e+00> : vector<16x16xf32>
    %274 = tpu.matmul %273, %272, %cst_141 {dimension_numbers = #tpu.dot_dimension_numbers<[1], [0], [0], [1], [0, 0, 1, 1], [], []>} : vector<16x144xbf16>, vector<144x16xbf16>, vector<16x16xf32> -> vector<16x16xf32>
    %c0_142 = arith.constant 0 : index
    %c8_143 = arith.constant 8 : index
    %275 = vector.load %arg4[%c0_142, %c8_143] : memref<16x9xf32, #tpu.memory_space<vmem>>, vector<16x1xf32>
    %276 = vector.broadcast %275 : vector<16x1xf32> to vector<16x16xf32>
    %277 = arith.addf %274, %276 : vector<16x16xf32>
    %cst_144 = arith.constant 2.000000e-01 : f32
    %278 = vector.broadcast %cst_144 : f32 to vector<16x16xf32>
    %279 = arith.mulf %278, %277 : vector<16x16xf32>
    %280 = arith.maximumf %277, %279 : vector<16x16xf32>
    %281 = arith.addf %280, %238 : vector<16x16xf32>
    %282 = arith.truncf %281 : vector<16x16xf32> to vector<16x16xbf16>
    %c432 = arith.constant 432 : index
    %c0_145 = arith.constant 0 : index
    %283 = vector.load %arg3[%c432, %c0_145] : memref<704x256xbf16, #tpu.memory_space<vmem>>, vector<16x256xbf16>
    %cst_146 = arith.constant dense<0.000000e+00> : vector<16x256xf32>
    %284 = tpu.matmul %282, %283, %cst_146 {dimension_numbers = #tpu.dot_dimension_numbers<[1], [0], [0], [1], [0, 0, 1, 1], [], []>} : vector<16x16xbf16>, vector<16x256xbf16>, vector<16x256xf32> -> vector<16x256xf32>
    %c24_147 = arith.constant 24 : index
    %c0_148 = arith.constant 0 : index
    %285 = vector.load %arg5[%c24_147, %c0_148] : memref<48x256xf32, #tpu.memory_space<vmem>>, vector<16x256xf32>
    %286 = arith.mulf %284, %285 : vector<16x256xf32>
    %cst_149 = arith.constant dense<0.000000e+00> : vector<256xf32>
    %287 = vector.multi_reduction <add>, %286, %cst_149 [0] : vector<16x256xf32> to vector<256xf32>
    %288 = vector.shape_cast %287 : vector<256xf32> to vector<1x256xf32>
    %c448 = arith.constant 448 : index
    %c0_150 = arith.constant 0 : index
    %289 = vector.load %arg3[%c448, %c0_150] : memref<704x256xbf16, #tpu.memory_space<vmem>>, vector<256x16xbf16>
    %290 = arith.truncf %288 : vector<1x256xf32> to vector<1x256xbf16>
    %cst_151 = arith.constant dense<0.000000e+00> : vector<1x16xf32>
    %291 = tpu.matmul %290, %289, %cst_151 {dimension_numbers = #tpu.dot_dimension_numbers<[1], [0], [0], [1], [0, 0, 1, 1], [], []>} : vector<1x256xbf16>, vector<256x16xbf16>, vector<1x16xf32> -> vector<1x16xf32>
    %c40 = arith.constant 40 : index
    %c0_152 = arith.constant 0 : index
    %292 = vector.load %arg5[%c40, %c0_152] : memref<48x256xf32, #tpu.memory_space<vmem>>, vector<1x16xf32>
    %293 = arith.addf %291, %292 : vector<1x16xf32>
    %c0_153 = arith.constant 0 : index
    %c0_154 = arith.constant 0 : index
    %c0_155 = arith.constant 0 : index
    %294 = vector.load %arg2[%c0_153, %c0_154, %c0_155] : memref<1x1x16xf32, #tpu.memory_space<vmem>>, vector<1x1x16xf32>
    %295 = vector.shape_cast %294 : vector<1x1x16xf32> to vector<1x16xf32>
    %296 = arith.mulf %295, %293 : vector<1x16xf32>
    %cst_156 = arith.constant dense<0.000000e+00> : vector<1xf32>
    %297 = vector.multi_reduction <add>, %296, %cst_156 [1] : vector<1x16xf32> to vector<1xf32>
    %298 = vector.shape_cast %297 : vector<1xf32> to vector<1x1xf32>
    %c0_157 = arith.constant 0 : index
    %c0_158 = arith.constant 0 : index
    %c0_159 = arith.constant 0 : index
    %299 = vector.load %arg6[%c0_157, %c0_158, %c0_159] : memref<1x1x1xf32, #tpu.memory_space<vmem>>, vector<1x1x1xf32>
    %300 = vector.shape_cast %299 : vector<1x1x1xf32> to vector<1x1xf32>
    %301 = vector.shape_cast %298 : vector<1x1xf32> to vector<1x1x1xf32>
    tpu.vector_store %arg6[%c0_157, %c0_158, %c0_159], %301 {strides = array<i32>} : memref<1x1x1xf32, #tpu.memory_space<vmem>>, vector<1x1x1xf32>,
    return
  }
  func.func @transform_0(%arg0: i32) -> (i32, i32, i32) {
    %c0_i32 = arith.constant 0 : i32
    %c0_i32_0 = arith.constant 0 : i32
    %c0_i32_1 = arith.constant 0 : i32
    return %arg0, %c0_i32, %c0_i32_0 : i32, i32, i32
  }
  func.func @transform_1(%arg0: i32) -> (i32, i32, i32) {
    %c0_i32 = arith.constant 0 : i32
    %c0_i32_0 = arith.constant 0 : i32
    %c0_i32_1 = arith.constant 0 : i32
    return %arg0, %c0_i32, %c0_i32_0 : i32, i32, i32
  }
  func.func @transform_2(%arg0: i32) -> (i32, i32) {
    %c0_i32 = arith.constant 0 : i32
    %c0_i32_0 = arith.constant 0 : i32
    %c0_i32_1 = arith.constant 0 : i32
    return %c0_i32, %c0_i32_0 : i32, i32
  }
  func.func @transform_3(%arg0: i32) -> (i32, i32) {
    %c0_i32 = arith.constant 0 : i32
    %c0_i32_0 = arith.constant 0 : i32
    %c0_i32_1 = arith.constant 0 : i32
    return %c0_i32, %c0_i32_0 : i32, i32
  }
  func.func @transform_4(%arg0: i32) -> (i32, i32) {
    %c0_i32 = arith.constant 0 : i32
    %c0_i32_0 = arith.constant 0 : i32
    %c0_i32_1 = arith.constant 0 : i32
    return %c0_i32, %c0_i32_0 : i32, i32
  }
  func.func @transform_5(%arg0: i32) -> (i32, i32, i32) {
    %c0_i32 = arith.constant 0 : i32
    %c0_i32_0 = arith.constant 0 : i32
    %c0_i32_1 = arith.constant 0 : i32
    return %arg0, %c0_i32, %c0_i32_0 : i32, i32, i32
  }
}

</mosaic_0001>

<llo_original>
// kernel: forward.1
$region0: #{forward.1}
  #allocation0 [shape = 'u32[]', space=smem, size = 0x4, offset = 0x4, fixed_abs, tag = 'smem constant byte address 0x4 - core index']
  #allocation1 [shape = 'u32[144,128]{1,0:T(1,128)}', space=vmem, size = 0x12000, scoped, tag = 'internal scratch']
  %s0 = inlined_call_operand.vmem [shape: f32[2,3,256], index: 0, kind: input, shape index: {}]
  %s1 = inlined_call_operand.vmem [shape: f32[2,1,16], index: 1, kind: input, shape index: {}]
  %s2 = inlined_call_operand.hbm [shape: bf16[704,256], index: 2, kind: input, shape index: {}]
  %s3 = inlined_call_operand.vmem [shape: f32[16,9], index: 3, kind: input, shape index: {}]
  %s4 = inlined_call_operand.vmem [shape: f32[48,256], index: 4, kind: input, shape index: {}]
  %s5 = inlined_call_operand.vmem [shape: f32[2,1,1], index: 5, kind: output, shape index: {}]
  %s6 = sld [smem:[#allocation0]]
  $region57: #{forward.1} parent=0
    _
  %s8 = ssub.s32 1, %s6
  %s9 = scalar_select 0, %s8, %s6
  $region1: #{forward.1} parent=0
    #allocation2 [shape = 'u8[360448]{0}', space=vmem, size = 0x58000, scoped, tag = 'input window, operand 2, single buffered']
    #allocation3 [shape = 's32[2]{0}', space=sflag, size = 0x8, scoped, tag = 'scoped memory for forward.1']
    %10 = vsyncpa [#allocation3], 0
    loop: start=0, step=1, limit=4
    $region2: #{forward.1} parent=1 // loop_pre_header
      _
    $region3: #{forward.1} parent=1 // loop_header
      %s12 = sphi 0, %s16
      %p13 = scmp.ge.s32.totalorder %s12, 4
      %s22 = sphi 0, %s24
      %s25 = sphi 0, %s22
      %s26 = sphi 0, %s25
      %s42 = sphi 0, %s26
      %s48 = sphi 0, %s50
      %s51 = sphi 0, %s48
      %s52 = sphi 0, %s51
      %s68 = sphi 0, %s52
      %s72 = sphi 0, %s72
      %s74 = sphi 0, %s72
      %s75 = sphi 0, %s74
      %s89 = sphi 0, %s75
      %s93 = sphi 0, %s93
      %s95 = sphi 0, %s93
      %s96 = sphi 0, %s95
      %s110 = sphi 0, %s96
      %s114 = sphi 0, %s114
      %s116 = sphi 0, %s114
      %s117 = sphi 0, %s116
      %s131 = sphi 0, %s117
      %s137 = sphi 0, %s139
      %s140 = sphi 0, %s137
      %s141 = sphi 0, %s140
      %s157 = sphi 0, %s141
    $region4: #{forward.1} parent=1 // loop_header_branch
      %15 = sbr.rel (%p13) target = $region8
    $region5: #{forward.1} parent=1 // loop_body
      %s17 = ssub.s32 %s12, 1
      %s18 = ssub.s32 %s12, 2
      %s19 = sadd.s32 %s12, 1
      %s20 = ssub.s32 %s12, %s19
      %p21 = scmp.eq.s32.totalorder %s20, 0
      %s23 = sadd.s32 %s22, 1
      %s24 = scalar_select %p21, %s22, %s23
      %p27 = pneg %p21
      %p28 = scmp.eq.s32.totalorder %s12, 1
      %p29 = por %p27, %p28
      %p30 = scmp.ne.s32.totalorder %s22, %s25
      %p31 = scmp.eq.s32.totalorder %s12, 0
      %p32 = por %p30, %p31
      %p33 = scmp.ne.s32.totalorder %s22, %s25
      %p34 = scmp.eq.s32.totalorder %s17, 1
      %p35 = por %p33, %p34
      %p36 = scmp.ne.s32.totalorder %s25, %s26
      %p37 = scmp.eq.s32.totalorder %s17, 0
      %p38 = por %p36, %p37
      %p39 = scmp.ne.s32.totalorder %s25, %s26
      %p40 = scmp.eq.s32.totalorder %s18, 1
      %p41 = por %p39, %p40
      %p43 = scmp.ne.s32.totalorder %s26, %s42
      %p44 = scmp.eq.s32.totalorder %s18, 0
      %p45 = por %p43, %p44
      %s46 = ssub.s32 %s12, %s19
      %p47 = scmp.eq.s32.totalorder %s46, 0
      %s49 = sadd.s32 %s48, 1
      %s50 = scalar_select %p47, %s48, %s49
      %p53 = pneg %p47
      %p54 = scmp.eq.s32.totalorder %s12, 1
      %p55 = por %p53, %p54
      %p56 = scmp.ne.s32.totalorder %s48, %s51
      %p57 = scmp.eq.s32.totalorder %s12, 0
      %p58 = por %p56, %p57
      %p59 = scmp.ne.s32.totalorder %s48, %s51
      %p60 = scmp.eq.s32.totalorder %s17, 1
      %p61 = por %p59, %p60
      %p62 = scmp.ne.s32.totalorder %s51, %s52
      %p63 = scmp.eq.s32.totalorder %s17, 0
      %p64 = por %p62, %p63
      %p65 = scmp.ne.s32.totalorder %s51, %s52
      %p66 = scmp.eq.s32.totalorder %s18, 1
      %p67 = por %p65, %p66
      %p69 = scmp.ne.s32.totalorder %s52, %s68
      %p70 = scmp.eq.s32.totalorder %s18, 0
      %p71 = por %p69, %p70
      %s73 = sadd.s32 %s72, 1
      %p76 = scmp.eq.s32.totalorder %s12, 1
      %p77 = scmp.ne.s32.totalorder %s72, %s74
      %p78 = scmp.eq.s32.totalorder %s12, 0
      %p79 = por %p77, %p78
      %p80 = scmp.ne.s32.totalorder %s72, %s74
      %p81 = scmp.eq.s32.totalorder %s17, 1
      %p82 = por %p80, %p81
      %p83 = scmp.ne.s32.totalorder %s74, %s75
      %p84 = scmp.eq.s32.totalorder %s17, 0
      %p85 = por %p83, %p84
      %p86 = scmp.ne.s32.totalorder %s74, %s75
      %p87 = scmp.eq.s32.totalorder %s18, 1
      %p88 = por %p86, %p87
      %p90 = scmp.ne.s32.totalorder %s75, %s89
      %p91 = scmp.eq.s32.totalorder %s18, 0
      %p92 = por %p90, %p91
      %s94 = sadd.s32 %s93, 1
      %p97 = scmp.eq.s32.totalorder %s12, 1
      %p98 = scmp.ne.s32.totalorder %s93, %s95
      %p99 = scmp.eq.s32.totalorder %s12, 0
      %p100 = por %p98, %p99
      %p101 = scmp.ne.s32.totalorder %s93, %s95
      %p102 = scmp.eq.s32.totalorder %s17, 1
      %p103 = por %p101, %p102
      %p104 = scmp.ne.s32.totalorder %s95, %s96
      %p105 = scmp.eq.s32.totalorder %s17, 0
      %p106 = por %p104, %p105
      %p107 = scmp.ne.s32.totalorder %s95, %s96
      %p108 = scmp.eq.s32.totalorder %s18, 1
      %p109 = por %p107, %p108
      %p111 = scmp.ne.s32.totalorder %s96, %s110
      %p112 = scmp.eq.s32.totalorder %s18, 0
      %p113 = por %p111, %p112
      %s115 = sadd.s32 %s114, 1
      %p118 = scmp.eq.s32.totalorder %s12, 1
      %p119 = scmp.ne.s32.totalorder %s114, %s116
      %p120 = scmp.eq.s32.totalorder %s12, 0
      %p121 = por %p119, %p120
      %p122 = scmp.ne.s32.totalorder %s114, %s116
      %p123 = scmp.eq.s32.totalorder %s17, 1
      %p124 = por %p122, %p123
      %p125 = scmp.ne.s32.totalorder %s116, %s117
      %p126 = scmp.eq.s32.totalorder %s17, 0
      %p127 = por %p125, %p126
      %p128 = scmp.ne.s32.totalorder %s116, %s117
      %p129 = scmp.eq.s32.totalorder %s18, 1
      %p130 = por %p128, %p129
      %p132 = scmp.ne.s32.totalorder %s117, %s131
      %p133 = scmp.eq.s32.totalorder %s18, 0
      %p134 = por %p132, %p133
      %s135 = ssub.s32 %s12, %s19
      %p136 = scmp.eq.s32.totalorder %s135, 0
      %s138 = sadd.s32 %s137, 1
      %s139 = scalar_select %p136, %s137, %s138
      %p142 = pneg %p136
      %p143 = scmp.eq.s32.totalorder %s12, 1
      %p144 = por %p142, %p143
      %p145 = scmp.ne.s32.totalorder %s137, %s140
      %p146 = scmp.eq.s32.totalorder %s12, 0
      %p147 = por %p145, %p146
      %p148 = scmp.ne.s32.totalorder %s137, %s140
      %p149 = scmp.eq.s32.totalorder %s17, 1
      %p150 = por %p148, %p149
      %p151 = scmp.ne.s32.totalorder %s140, %s141
      %p152 = scmp.eq.s32.totalorder %s17, 0
      %p153 = por %p151, %p152
      %p154 = scmp.ne.s32.totalorder %s140, %s141
      %p155 = scmp.eq.s32.totalorder %s18, 1
      %p156 = por %p154, %p155
      %p158 = scmp.ne.s32.totalorder %s141, %s157
      %p159 = scmp.eq.s32.totalorder %s18, 0
      %p160 = por %p158, %p159
      %p161 = scmp.le.s32.totalorder 1, %s12
      %p162 = scmp.lt.s32.totalorder %s12, 3
      %p163 = pnand %p161, %p162
      %p164 = pneg %p163
      // Predicated region
      $region9: #{forward.1} parent=5 // pred_check
        _
      $region10: #{forward.1} parent=5 // pred_check_branch
        %166 = sbr.rel (%p163) target = $region12
      $region11: #{forward.1} parent=5 // pred_region
        %s167 = ssub.s32 %s12, 1
        // Predicated region
        $region13: #{forward.1} parent=11 // pred_check
          %p168 = pneg %p85
        $region14: #{forward.1} parent=11 // pred_check_branch
          %170 = sbr.rel (%p168) target = $region16
        $region15: #{forward.1} parent=11 // pred_region
          %s172 = ssub.s32 11264, 11264
          %173 = vsyncadd [#allocation3], %s172
          %s174 = sshll.u32 [#allocation2], 4
          %s175 = int_to_ptr.vmem [resolvable:$true] %s174
          %180 = dma.hbm_to_vmem [thread:$0]  %s2, 11264, %s175, [#allocation3], 128, 128, 8
        $region16: #{forward.1} parent=11 // pred_fallthru
          _
        // Predicated region
        $region17: #{forward.1} parent=11 // pred_check
          %p181 = pneg %p106
        $region18: #{forward.1} parent=11 // pred_check_branch
          %183 = sbr.rel (%p181) target = $region20
        $region19: #{forward.1} parent=11 // pred_region
          _
        $region20: #{forward.1} parent=11 // pred_fallthru
          _
        // Predicated region
        $region21: #{forward.1} parent=11 // pred_check
          %p184 = pneg %p127
        $region22: #{forward.1} parent=11 // pred_check_branch
          %186 = sbr.rel (%p184) target = $region24
        $region23: #{forward.1} parent=11 // pred_region
          _
        $region24: #{forward.1} parent=11 // pred_fallthru
          _
      $region12: #{forward.1} parent=5 // pred_fallthru
        _
      %p187 = scmp.lt.s32.totalorder %s12, 2
      // Predicated region
      $region25: #{forward.1} parent=5 // pred_check
        %p188 = pneg %p187
      $region26: #{forward.1} parent=5 // pred_check_branch
        %190 = sbr.rel (%p188) target = $region28
      $region27: #{forward.1} parent=5 // pred_region
        // Predicated region
        $region29: #{forward.1} parent=27 // pred_check
          %p191 = pneg %p32
        $region30: #{forward.1} parent=27 // pred_check_branch
          %193 = sbr.rel (%p191) target = $region32
        $region31: #{forward.1} parent=27 // pred_region
          %p194 = scmp.lt.s32.totalorder %s12, 1
          %s195 = scalar_select %p194, %s12, 1
          %s196 = smul.addr %s195, 2
          %s197 = smul.addr %s196, 4
          %s198 = scalar_lea.vmem %s0, %s197
        $region32: #{forward.1} parent=27 // pred_fallthru
          _
        // Predicated region
        $region33: #{forward.1} parent=27 // pred_check
          %p199 = pneg %p58
        $region34: #{forward.1} parent=27 // pred_check_branch
          %201 = sbr.rel (%p199) target = $region36
        $region35: #{forward.1} parent=27 // pred_region
          %p202 = scmp.lt.s32.totalorder %s12, 1
          %s203 = scalar_select %p202, %s12, 1
          %s204 = scalar_lea.vmem %s1, %s203
        $region36: #{forward.1} parent=27 // pred_fallthru
          _
      $region28: #{forward.1} parent=5 // pred_fallthru
        _
      %p205 = scmp.le.s32.totalorder 1, %s12
      %p206 = scmp.lt.s32.totalorder %s12, 3
      %p207 = pnand %p205, %p206
      %p208 = pneg %p207
      // Predicated region
      $region37: #{forward.1} parent=5 // pred_check
        _
      $region38: #{forward.1} parent=5 // pred_check_branch
        %210 = sbr.rel (%p207) target = $region40
      $region39: #{forward.1} parent=5 // pred_region
        %s211 = ssub.s32 %s12, 1
        // Predicated region
        $region41: #{forward.1} parent=39 // pred_check
          %p212 = pneg %p85
        $region42: #{forward.1} parent=39 // pred_check_branch
          %214 = sbr.rel (%p212) target = $region44
        $region43: #{forward.1} parent=39 // pred_region
          %215 = dma.done [#allocation3], 11264
        $region44: #{forward.1} parent=39 // pred_fallthru
          _
        %p216 = scmp.lt.s32.totalorder %s17, 1
        %s217 = scalar_select %p216, %s17, 1
        %s218 = smul.addr %s217, 2
        %s219 = smul.addr %s218, 4
        %s220 = scalar_lea.vmem %s0, %s219
        %p221 = pneg %p38
        %p222 = pneg %p35
        %p223 = scmp.lt.s32.totalorder %s17, 1
        %s224 = scalar_select %p223, %s17, 1
        %s225 = scalar_lea.vmem %s1, %s224
        %p226 = pneg %p64
        %p227 = pneg %p61
        %p228 = pneg %p85
        %p229 = pneg %p82
        %p230 = pneg %p106
        %p231 = pneg %p103
        %p232 = pneg %p127
        %p233 = pneg %p124
        %p234 = pneg %p153
        %p235 = pneg %p150
        %p236 = scmp.lt.s32.totalorder %s17, 1
        %s237 = scalar_select %p236, %s17, 1
        %s238 = scalar_lea.vmem %s5, %s237
        %p239 = scmp.lt.s32.totalorder %s17, 1
        %s240 = scalar_select %p239, %s17, 1
        %s241 = smul.addr %s240, 2
        %s242 = smul.addr %s241, 4
        %s243 = scalar_lea.vmem %s0, %s242
        %p244 = scmp.lt.s32.totalorder %s17, 1
        %s245 = scalar_select %p244, %s17, 1
        %s246 = scalar_lea.vmem %s1, %s245
        %p247 = scmp.lt.s32.totalorder %s17, 1
        %s248 = scalar_select %p247, %s17, 1
        %s249 = scalar_lea.vmem %s5, %s248
        %v251 = vld [vmem:[%s243] sm:$0x77]
        %v253 = vcombine.high %v251, %v251
        %v255 = vpack.c.bf16 %v251, %v251
        %v256 = vpack.c.bf16 %v253, %v253
        %v257 = vld [vmem:[#allocation2] sm:$0xf]
        %v258 = vld [vmem:[%s3] sm:$0xff]
        %260 = vset.pattern.permute.xlu0 0
        %261 = vperm.xlu0 %260, %v258
        %v262 = vpop.permute.xlu0 %261
        %vm264 = vcmask 23552
        %v266 = vsel %vm264, %v257, 0
        %vm268 = vcmask 1040384
        %vm269 = vcmask 1041408
        %v270 = vsel %vm268, 4294967295, 65535
        %v271 = vsel %vm269, %v270, 0
        %v273 = vand.u32 %v255, %v271
        %v276 = vand.u32 %v256, %v271
        %278 = vmatprep.subr.bf16.mxu0 0
        %279 = vmatpush1.bf16.msra.mxu0 0
        %280 = vmatprep.subr.bf16.mxu0 0
        %281 = vmatpush1.bf16.msra.mxu0 0
        %282 = vmatprep.subr.bf16.mxu0 0
        %283 = vmatpush1.bf16.msra.mxu0 0
        %284 = vmatprep.subr.bf16.mxu0 0
        %285 = vmatpush1.bf16.msra.mxu0 0
        %286 = vmatprep.subr.bf16.mxu0 0
        %287 = vmatpush1.bf16.msra.mxu0 0
        %288 = vmatprep.subr.bf16.mxu0 0
        %289 = vmatpush1.bf16.msra.mxu0 0
        %290 = vmatprep.subr.bf16.mxu0 0
        %291 = vmatpush1.bf16.msra.mxu0 0
        %292 = vmatprep.subr.bf16.mxu0 %v276
        %293 = vmatpush1.bf16.msra.mxu0 %v273
        %294 = vmatprep.subr.bf16.mxu0 0
        %295 = vmatpush2.bf16.msra.mxu0 0
        %296 = vmatprep.subr.bf16.mxu0 0
        %297 = vmatpush2.bf16.msra.mxu0 0
        %298 = vmatprep.subr.bf16.mxu0 0
        %299 = vmatpush2.bf16.msra.mxu0 0
        %300 = vmatprep.subr.bf16.mxu0 0
        %301 = vmatpush2.bf16.msra.mxu0 0
        %302 = vmatprep.subr.bf16.mxu0 0
        %303 = vmatpush2.bf16.msra.mxu0 0
        %304 = vmatprep.subr.bf16.mxu0 0
        %305 = vmatpush2.bf16.msra.mxu0 0
        %306 = vmatprep.subr.bf16.mxu0 0
        %307 = vmatpush2.bf16.msra.mxu0 0
        %308 = vmatprep.subr.bf16.mxu0 0
        %309 = vmatpush2.bf16.msra.mxu0 0
        %310 = vmatprep.mubr.bf16.mxu0 0
        %311 = vmatmul.mubr.bf16.gmra.mxu0 %v266
        %v312 = vpop.f32.mrf.mxu0
        %v313 = vadd.f32 %v262, %v312
        %v314 = vpop.f32.mrf.mxu0
        %v315 = vadd.f32 %v262, %v314
        %v316 = vpop.f32.mrf.mxu0
        %v317 = vpop.f32.mrf.mxu0
        %318 = vdwg.mxu0
        %319 = vrot.lane.b32.xlu0 %v313, 17
        %v320 = vpop.permute.xlu0 %319
        %321 = vrot.lane.b32.xlu0 %v315, 17
        %v322 = vpop.permute.xlu0 %321
        %v323 = vlaneseq
        %v324 = vand.u32 %v323, 127
        %vm325 = vcmp.lt.s32.totalorder %v324, 17
        %v326 = vsel %vm325, %v320, %v322
        %v327 = vsel %vm325, %v322, %v320
        %v328 = vld [vmem:[%s4] ss:$8 sm:$0x3]
        %v330 = vlaneseq
        %v331 = vshrl.u32 %v330, 7
        %v332 = vsub.s32 0, %v331
        %v333 = vrot.slane %v328, %v332
        %v334 = vlaneseq
        %v335 = vshrl.u32 %v334, 7
        %v336 = vsub.s32 1, %v335
        %v337 = vrot.slane %v328, %v336
        %v340 = vmul.f32 %v327, %v333
        %v341 = vmul.f32 %v326, %v337
        %342 = vrot.lane.b32.xlu0 %v313, 16
        %v343 = vpop.permute.xlu0 %342
        %344 = vrot.lane.b32.xlu0 %v315, 16
        %v345 = vpop.permute.xlu0 %344
        %vm346 = vcmp.lt.s32.totalorder %v324, 16
        %v347 = vsel %vm346, %v343, %v345
        %v348 = vsel %vm346, %v345, %v343
        %s349 = scalar_lea.vmem %s4, 1
        %v350 = vld [vmem:[%s349] ss:$8 sm:$0x3]
        %v352 = vlaneseq
        %v353 = vshrl.u32 %v352, 7
        %v354 = vsub.s32 0, %v353
        %v355 = vrot.slane %v350, %v354
        %v356 = vlaneseq
        %v357 = vshrl.u32 %v356, 7
        %v358 = vsub.s32 1, %v357
        %v359 = vrot.slane %v350, %v358
        %v362 = vmul.f32 %v348, %v355
        %v363 = vmul.f32 %v347, %v359
        %364 = vrot.lane.b32.xlu0 %v313, 15
        %v365 = vpop.permute.xlu0 %364
        %366 = vrot.lane.b32.xlu0 %v315, 15
        %v367 = vpop.permute.xlu0 %366
        %vm368 = vcmp.lt.s32.totalorder %v324, 15
        %v369 = vsel %vm368, %v365, %v367
        %v370 = vsel %vm368, %v367, %v365
        %s371 = scalar_lea.vmem %s4, 2
        %v372 = vld [vmem:[%s371] ss:$8 sm:$0x3]
        %v374 = vlaneseq
        %v375 = vshrl.u32 %v374, 7
        %v376 = vsub.s32 0, %v375
        %v377 = vrot.slane %v372, %v376
        %v378 = vlaneseq
        %v379 = vshrl.u32 %v378, 7
        %v380 = vsub.s32 1, %v379
        %v381 = vrot.slane %v372, %v380
        %v384 = vmul.f32 %v370, %v377
        %v385 = vmul.f32 %v369, %v381
        %386 = vrot.lane.b32.xlu0 %v313, 1
        %v387 = vpop.permute.xlu0 %386
        %388 = vrot.lane.b32.xlu0 %v315, 1
        %v389 = vpop.permute.xlu0 %388
        %vm390 = vcmp.lt.s32.totalorder %v324, 1
        %v391 = vsel %vm390, %v387, %v389
        %v392 = vsel %vm390, %v389, %v387
        %s393 = scalar_lea.vmem %s4, 3
        %v394 = vld [vmem:[%s393] ss:$8 sm:$0x3]
        %v396 = vlaneseq
        %v397 = vshrl.u32 %v396, 7
        %v398 = vsub.s32 0, %v397
        %v399 = vrot.slane %v394, %v398
        %v400 = vlaneseq
        %v401 = vshrl.u32 %v400, 7
        %v402 = vsub.s32 1, %v401
        %v403 = vrot.slane %v394, %v402
        %v406 = vmul.f32 %v392, %v399
        %v407 = vmul.f32 %v391, %v403
        %408 = vrot.lane.b32.xlu0 %v313, 127
        %v409 = vpop.permute.xlu0 %408
        %410 = vrot.lane.b32.xlu0 %v315, 127
        %v411 = vpop.permute.xlu0 %410
        %vm412 = vcmp.lt.s32.totalorder %v324, 127
        %v413 = vsel %vm412, %v409, %v411
        %v414 = vsel %vm412, %v411, %v409
        %s415 = scalar_lea.vmem %s4, 4
        %v416 = vld [vmem:[%s415] ss:$8 sm:$0x3]
        %v418 = vlaneseq
        %v419 = vshrl.u32 %v418, 7
        %v420 = vsub.s32 0, %v419
        %v421 = vrot.slane %v416, %v420
        %v422 = vlaneseq
        %v423 = vshrl.u32 %v422, 7
        %v424 = vsub.s32 1, %v423
        %v425 = vrot.slane %v416, %v424
        %v428 = vmul.f32 %v413, %v421
        %v429 = vmul.f32 %v414, %v425
        %430 = vrot.lane.b32.xlu0 %v313, 113
        %v431 = vpop.permute.xlu0 %430
        %432 = vrot.lane.b32.xlu0 %v315, 113
        %v433 = vpop.permute.xlu0 %432
        %vm434 = vcmp.lt.s32.totalorder %v324, 113
        %v435 = vsel %vm434, %v431, %v433
        %v436 = vsel %vm434, %v433, %v431
        %s437 = scalar_lea.vmem %s4, 5
        %v438 = vld [vmem:[%s437] ss:$8 sm:$0x3]
        %v440 = vlaneseq
        %v441 = vshrl.u32 %v440, 7
        %v442 = vsub.s32 0, %v441
        %v443 = vrot.slane %v438, %v442
        %v444 = vlaneseq
        %v445 = vshrl.u32 %v444, 7
        %v446 = vsub.s32 1, %v445
        %v447 = vrot.slane %v438, %v446
        %v450 = vmul.f32 %v435, %v443
        %v451 = vmul.f32 %v436, %v447
        %452 = vrot.lane.b32.xlu0 %v313, 112
        %v453 = vpop.permute.xlu0 %452
        %454 = vrot.lane.b32.xlu0 %v315, 112
        %v455 = vpop.permute.xlu0 %454
        %vm456 = vcmp.lt.s32.totalorder %v324, 112
        %v457 = vsel %vm456, %v453, %v455
        %v458 = vsel %vm456, %v455, %v453
        %s459 = scalar_lea.vmem %s4, 6
        %v460 = vld [vmem:[%s459] ss:$8 sm:$0x3]
        %v462 = vlaneseq
        %v463 = vshrl.u32 %v462, 7
        %v464 = vsub.s32 0, %v463
        %v465 = vrot.slane %v460, %v464
        %v466 = vlaneseq
        %v467 = vshrl.u32 %v466, 7
        %v468 = vsub.s32 1, %v467
        %v469 = vrot.slane %v460, %v468
        %v472 = vmul.f32 %v457, %v465
        %v473 = vmul.f32 %v458, %v469
        %474 = vrot.lane.b32.xlu0 %v313, 111
        %v475 = vpop.permute.xlu0 %474
        %476 = vrot.lane.b32.xlu0 %v315, 111
        %v477 = vpop.permute.xlu0 %476
        %vm478 = vcmp.lt.s32.totalorder %v324, 111
        %v479 = vsel %vm478, %v475, %v477
        %v480 = vsel %vm478, %v477, %v475
        %s481 = scalar_lea.vmem %s4, 7
        %v482 = vld [vmem:[%s481] ss:$8 sm:$0x3]
        %v484 = vlaneseq
        %v485 = vshrl.u32 %v484, 7
        %v486 = vsub.s32 0, %v485
        %v487 = vrot.slane %v482, %v486
        %v488 = vlaneseq
        %v489 = vshrl.u32 %v488, 7
        %v490 = vsub.s32 1, %v489
        %v491 = vrot.slane %v482, %v490
        %v494 = vmul.f32 %v479, %v487
        %v495 = vmul.f32 %v480, %v491
        %v496 = vpack.c.bf16 %v362, %v340
        %v497 = vpack.c.bf16 %v363, %v341
        %v498 = vpack.c.bf16 %v406, %v384
        %v499 = vpack.c.bf16 %v407, %v385
        %v500 = vpack.c.bf16 %v428, %v313
        %v501 = vpack.c.bf16 %v429, %v315
        %v502 = vpack.c.bf16 %v472, %v450
        %v503 = vpack.c.bf16 %v473, %v451
        %v504 = vpack.c.bf16 %v494, %v494
        %v505 = vpack.c.bf16 %v495, %v495
        %v506 = vld [vmem:[#allocation2 + $0x8] sm:$0xf]
        %v507 = vld [vmem:[#allocation2 + $0x10] sm:$0xf]
        %v510 = vunpack.c.l.b16 %v506
        %v511 = vunpack.c.l.b16 %v507
        %v512 = vpack.c.b16 %v511, %v510
        %vm513 = vcmask 588800
        %v515 = vsel %vm513, %v512, 0
        %vm517 = vcmask 1043456
        %v519 = vsel %vm517, %v504, 0
        %v522 = vsel %vm517, %v505, 0
        %524 = vmatprep.subr.bf16.mxu0 0
        %525 = vmatpush1.bf16.msra.mxu0 0
        %526 = vmatprep.subr.bf16.mxu0 0
        %527 = vmatpush1.bf16.msra.mxu0 0
        %528 = vmatprep.subr.bf16.mxu0 0
        %529 = vmatpush1.bf16.msra.mxu0 0
        %530 = vmatprep.subr.bf16.mxu0 %v522
        %531 = vmatpush1.bf16.msra.mxu0 %v519
        %532 = vmatprep.subr.bf16.mxu0 %v503
        %533 = vmatpush1.bf16.msra.mxu0 %v502
        %534 = vmatprep.subr.bf16.mxu0 %v501
        %535 = vmatpush1.bf16.msra.mxu0 %v500
        %536 = vmatprep.subr.bf16.mxu0 %v499
        %537 = vmatpush1.bf16.msra.mxu0 %v498
        %538 = vmatprep.subr.bf16.mxu0 %v497
        %539 = vmatpush1.bf16.msra.mxu0 %v496
        %540 = vmatprep.subr.bf16.mxu0 0
        %541 = vmatpush2.bf16.msra.mxu0 0
        %542 = vmatprep.subr.bf16.mxu0 0
        %543 = vmatpush2.bf16.msra.mxu0 0
        %544 = vmatprep.subr.bf16.mxu0 0
        %545 = vmatpush2.bf16.msra.mxu0 0
        %546 = vmatprep.subr.bf16.mxu0 0
        %547 = vmatpush2.bf16.msra.mxu0 0
        %548 = vmatprep.subr.bf16.mxu0 0
        %549 = vmatpush2.bf16.msra.mxu0 0
        %550 = vmatprep.subr.bf16.mxu0 0
        %551 = vmatpush2.bf16.msra.mxu0 0
        %552 = vmatprep.subr.bf16.mxu0 0
        %553 = vmatpush2.bf16.msra.mxu0 0
        %554 = vmatprep.subr.bf16.mxu0 0
        %555 = vmatpush2.bf16.msra.mxu0 0
        %556 = vmatprep.mubr.bf16.mxu0 0
        %557 = vmatmul.mubr.bf16.gmra.mxu0 %v515
        %v558 = vpop.f32.mrf.mxu0
        %v559 = vadd.f32 0.0, %v558
        %v560 = vpop.f32.mrf.mxu0
        %v561 = vadd.f32 0.0, %v560
        %v562 = vpop.f32.mrf.mxu0
        %v563 = vadd.f32 0.0, %v562
        %v564 = vpop.f32.mrf.mxu0
        %v565 = vadd.f32 0.0, %v564
        %566 = vdwg.mxu0
        %567 = vset.pattern.permute.xlu0 1
        %568 = vperm.xlu0 %567, %v258
        %v569 = vpop.permute.xlu0 %568
        %v571 = vadd.f32 %v559, %v569
        %v572 = vadd.f32 %v561, %v569
        %573 = vset.pattern.permute.xlu0 2
        %574 = vperm.xlu0 %573, %v258
        %v575 = vpop.permute.xlu0 %574
        %v577 = vadd.f32 %v563, %v575
        %v578 = vadd.f32 %v565, %v575
        %v579 = vmul.f32 %v571, 0.2
        %v580 = vmul.f32 %v572, 0.2
        %v581 = vmax.f32 %v571, %v579
        %v582 = vmax.f32 %v572, %v580
        %v583 = vadd.f32 %v581, %v577
        %v584 = vadd.f32 %v582, %v578
        %585 = vrot.lane.b32.xlu0 %v583, 17
        %v586 = vpop.permute.xlu0 %585
        %587 = vrot.lane.b32.xlu0 %v584, 17
        %v588 = vpop.permute.xlu0 %587
        %v589 = vsel %vm325, %v586, %v588
        %v590 = vsel %vm325, %v588, %v586
        %v591 = vmul.f32 %v590, %v333
        %v592 = vmul.f32 %v589, %v337
        %593 = vrot.lane.b32.xlu0 %v583, 16
        %v594 = vpop.permute.xlu0 %593
        %595 = vrot.lane.b32.xlu0 %v584, 16
        %v596 = vpop.permute.xlu0 %595
        %v597 = vsel %vm346, %v594, %v596
        %v598 = vsel %vm346, %v596, %v594
        %v599 = vmul.f32 %v598, %v355
        %v600 = vmul.f32 %v597, %v359
        %601 = vrot.lane.b32.xlu0 %v583, 15
        %v602 = vpop.permute.xlu0 %601
        %603 = vrot.lane.b32.xlu0 %v584, 15
        %v604 = vpop.permute.xlu0 %603
        %v605 = vsel %vm368, %v602, %v604
        %v606 = vsel %vm368, %v604, %v602
        %v607 = vmul.f32 %v606, %v377
        %v608 = vmul.f32 %v605, %v381
        %609 = vrot.lane.b32.xlu0 %v583, 1
        %v610 = vpop.permute.xlu0 %609
        %611 = vrot.lane.b32.xlu0 %v584, 1
        %v612 = vpop.permute.xlu0 %611
        %v613 = vsel %vm390, %v610, %v612
        %v614 = vsel %vm390, %v612, %v610
        %v615 = vmul.f32 %v614, %v399
        %v616 = vmul.f32 %v613, %v403
        %617 = vrot.lane.b32.xlu0 %v583, 127
        %v618 = vpop.permute.xlu0 %617
        %619 = vrot.lane.b32.xlu0 %v584, 127
        %v620 = vpop.permute.xlu0 %619
        %v621 = vsel %vm412, %v618, %v620
        %v622 = vsel %vm412, %v620, %v618
        %v623 = vmul.f32 %v621, %v421
        %v624 = vmul.f32 %v622, %v425
        %625 = vrot.lane.b32.xlu0 %v583, 113
        %v626 = vpop.permute.xlu0 %625
        %627 = vrot.lane.b32.xlu0 %v584, 113
        %v628 = vpop.permute.xlu0 %627
        %v629 = vsel %vm434, %v626, %v628
        %v630 = vsel %vm434, %v628, %v626
        %v631 = vmul.f32 %v629, %v443
        %v632 = vmul.f32 %v630, %v447
        %633 = vrot.lane.b32.xlu0 %v583, 112
        %v634 = vpop.permute.xlu0 %633
        %635 = vrot.lane.b32.xlu0 %v584, 112
        %v636 = vpop.permute.xlu0 %635
        %v637 = vsel %vm456, %v634, %v636
        %v638 = vsel %vm456, %v636, %v634
        %v639 = vmul.f32 %v637, %v465
        %v640 = vmul.f32 %v638, %v469
        %641 = vrot.lane.b32.xlu0 %v583, 111
        %v642 = vpop.permute.xlu0 %641
        %643 = vrot.lane.b32.xlu0 %v584, 111
        %v644 = vpop.permute.xlu0 %643
        %v645 = vsel %vm478, %v642, %v644
        %v646 = vsel %vm478, %v644, %v642
        %v647 = vmul.f32 %v645, %v487
        %v648 = vmul.f32 %v646, %v491
        %v649 = vpack.c.bf16 %v599, %v591
        %v650 = vpack.c.bf16 %v600, %v592
        %v651 = vpack.c.bf16 %v615, %v607
        %v652 = vpack.c.bf16 %v616, %v608
        %v653 = vpack.c.bf16 %v623, %v583
        %v654 = vpack.c.bf16 %v624, %v584
        %v655 = vpack.c.bf16 %v639, %v631
        %v656 = vpack.c.bf16 %v640, %v632
        %v657 = vpack.c.bf16 %v647, %v647
        %v658 = vpack.c.bf16 %v648, %v648
        %v659 = vld [vmem:[#allocation2 + $0x18] sm:$0xf]
        %660 = vset.pattern.permute.xlu0 3
        %661 = vperm.xlu0 %660, %v258
        %v662 = vpop.permute.xlu0 %661
        %v665 = vsel %vm513, %v659, 0
        %v668 = vsel %vm517, %v657, 0
        %v671 = vsel %vm517, %v658, 0
        %673 = vmatprep.subr.bf16.mxu0 0
        %674 = vmatpush1.bf16.msra.mxu0 0
        %675 = vmatprep.subr.bf16.mxu0 0
        %676 = vmatpush1.bf16.msra.mxu0 0
        %677 = vmatprep.subr.bf16.mxu0 0
        %678 = vmatpush1.bf16.msra.mxu0 0
        %679 = vmatprep.subr.bf16.mxu0 %v671
        %680 = vmatpush1.bf16.msra.mxu0 %v668
        %681 = vmatprep.subr.bf16.mxu0 %v656
        %682 = vmatpush1.bf16.msra.mxu0 %v655
        %683 = vmatprep.subr.bf16.mxu0 %v654
        %684 = vmatpush1.bf16.msra.mxu0 %v653
        %685 = vmatprep.subr.bf16.mxu0 %v652
        %686 = vmatpush1.bf16.msra.mxu0 %v651
        %687 = vmatprep.subr.bf16.mxu0 %v650
        %688 = vmatpush1.bf16.msra.mxu0 %v649
        %689 = vmatprep.subr.bf16.mxu0 0
        %690 = vmatpush2.bf16.msra.mxu0 0
        %691 = vmatprep.subr.bf16.mxu0 0
        %692 = vmatpush2.bf16.msra.mxu0 0
        %693 = vmatprep.subr.bf16.mxu0 0
        %694 = vmatpush2.bf16.msra.mxu0 0
        %695 = vmatprep.subr.bf16.mxu0 0
        %696 = vmatpush2.bf16.msra.mxu0 0
        %697 = vmatprep.subr.bf16.mxu0 0
        %698 = vmatpush2.bf16.msra.mxu0 0
        %699 = vmatprep.subr.bf16.mxu0 0
        %700 = vmatpush2.bf16.msra.mxu0 0
        %701 = vmatprep.subr.bf16.mxu0 0
        %702 = vmatpush2.bf16.msra.mxu0 0
        %703 = vmatprep.subr.bf16.mxu0 0
        %704 = vmatpush2.bf16.msra.mxu0 0
        %705 = vmatprep.mubr.bf16.mxu0 0
        %706 = vmatmul.mubr.bf16.gmra.mxu0 %v665
        %v707 = vpop.f32.mrf.mxu0
        %v708 = vadd.f32 %v662, %v707
        %v709 = vpop.f32.mrf.mxu0
        %v710 = vadd.f32 %v662, %v709
        %v711 = vpop.f32.mrf.mxu0
        %v712 = vpop.f32.mrf.mxu0
        %713 = vdwg.mxu0
        %v714 = vmul.f32 %v708, 0.2
        %v715 = vmul.f32 %v710, 0.2
        %v716 = vmax.f32 %v708, %v714
        %v717 = vmax.f32 %v710, %v715
        %v718 = vadd.f32 %v716, %v583
        %v719 = vadd.f32 %v717, %v584
        %v720 = vld [vmem:[#allocation2 + $0x20] sm:$0xf]
        %v721 = vld [vmem:[#allocation2 + $0x28] sm:$0xf]
        %v722 = vld [vmem:[#allocation2 + $0x30] sm:$0xf]
        %v723 = vld [vmem:[#allocation2 + $0x38] sm:$0xf]
        %v724 = vld [vmem:[#allocation2 + $0x40] sm:$0xf]
        %v725 = vld [vmem:[#allocation2 + $0x48] sm:$0xf]
        %v726 = vld [vmem:[#allocation2 + $0x50] sm:$0xf]
        %v727 = vld [vmem:[#allocation2 + $0x58] sm:$0xf]
        %v728 = vld [vmem:[#allocation2 + $0x60] sm:$0xf]
        %v729 = vld [vmem:[#allocation2 + $0x68] sm:$0xf]
        %v730 = vld [vmem:[#allocation2 + $0x70] sm:$0xf]
        %v731 = vld [vmem:[#allocation2 + $0x78] sm:$0xf]
        %v732 = vld [vmem:[#allocation2 + $0x80] sm:$0xf]
        %v733 = vld [vmem:[#allocation2 + $0x88] sm:$0xf]
        %v734 = vld [vmem:[#allocation2 + $0x90] sm:$0xf]
        %v735 = vld [vmem:[#allocation2 + $0x98] sm:$0xf]
        %v736 = vld [vmem:[#allocation2 + $0xa0] sm:$0xf]
        %v737 = vld [vmem:[#allocation2 + $0xa8] sm:$0xf]
        %v738 = vld [vmem:[#allocation2 + $0xb0] sm:$0xf]
        %v739 = vld [vmem:[#allocation2 + $0xb8] sm:$0xf]
        %v740 = vld [vmem:[#allocation2 + $0xc0] sm:$0xf]
        %v741 = vld [vmem:[#allocation2 + $0xc8] sm:$0xf]
        %v742 = vld [vmem:[#allocation2 + $0xd0] sm:$0xf]
        %v743 = vld [vmem:[#allocation2 + $0xd8] sm:$0xf]
        %v744 = vld [vmem:[#allocation2 + $0xe0] sm:$0xf]
        %v745 = vld [vmem:[#allocation2 + $0xe8] sm:$0xf]
        %v746 = vld [vmem:[#allocation2 + $0xf0] sm:$0xf]
        %v747 = vld [vmem:[#allocation2 + $0xf8] sm:$0xf]
        %v748 = vld [vmem:[#allocation2 + $0x100] sm:$0xf]
        %v749 = vld [vmem:[#allocation2 + $0x108] sm:$0xf]
        %v750 = vld [vmem:[#allocation2 + $0x110] sm:$0xf]
        %v751 = vld [vmem:[#allocation2 + $0x118] sm:$0xf]
        %v752 = vpack.c.bf16 %v718, %v718
        %v753 = vpack.c.bf16 %v719, %v719
        %v786 = vunpack.c.l.b16 %v720
        %v787 = vunpack.c.l.b16 %v721
        %v788 = vunpack.c.l.b16 %v722
        %v789 = vunpack.c.l.b16 %v723
        %v790 = vunpack.c.l.b16 %v724
        %v791 = vunpack.c.l.b16 %v725
        %v792 = vunpack.c.l.b16 %v726
        %v793 = vunpack.c.l.b16 %v727
        %v794 = vunpack.c.l.b16 %v728
        %v795 = vunpack.c.l.b16 %v729
        %v796 = vunpack.c.l.b16 %v730
        %v797 = vunpack.c.l.b16 %v731
        %v798 = vunpack.c.l.b16 %v732
        %v799 = vunpack.c.l.b16 %v733
        %v800 = vunpack.c.l.b16 %v734
        %v801 = vunpack.c.l.b16 %v735
        %v802 = vunpack.c.l.b16 %v736
        %v803 = vunpack.c.l.b16 %v737
        %v804 = vunpack.c.l.b16 %v738
        %v805 = vunpack.c.l.b16 %v739
        %v806 = vunpack.c.l.b16 %v740
        %v807 = vunpack.c.l.b16 %v741
        %v808 = vunpack.c.l.b16 %v742
        %v809 = vunpack.c.l.b16 %v743
        %v810 = vunpack.c.l.b16 %v744
        %v811 = vunpack.c.l.b16 %v745
        %v812 = vunpack.c.l.b16 %v746
        %v813 = vunpack.c.l.b16 %v747
        %v814 = vunpack.c.l.b16 %v748
        %v815 = vunpack.c.l.b16 %v749
        %v816 = vunpack.c.l.b16 %v750
        %v817 = vunpack.c.l.b16 %v751
        %v818 = vpack.c.b16 %v787, %v786
        %v819 = vpack.c.b16 %v789, %v788
        %v820 = vpack.c.b16 %v791, %v790
        %v821 = vpack.c.b16 %v793, %v792
        %v822 = vpack.c.b16 %v795, %v794
        %v823 = vpack.c.b16 %v797, %v796
        %v824 = vpack.c.b16 %v799, %v798
        %v825 = vpack.c.b16 %v801, %v800
        %v826 = vpack.c.b16 %v803, %v802
        %v827 = vpack.c.b16 %v805, %v804
        %v828 = vpack.c.b16 %v807, %v806
        %v829 = vpack.c.b16 %v809, %v808
        %v830 = vpack.c.b16 %v811, %v810
        %v831 = vpack.c.b16 %v813, %v812
        %v832 = vpack.c.b16 %v815, %v814
        %v833 = vpack.c.b16 %v817, %v816
        %850 = vmatprep.subr.bf16.mxu0 0
        %851 = vmatpush1.bf16.msra.mxu0 %v825
        %852 = vmatprep.subr.bf16.mxu0 0
        %853 = vmatpush1.bf16.msra.mxu0 %v824
        %854 = vmatprep.subr.bf16.mxu0 0
        %855 = vmatpush1.bf16.msra.mxu0 %v823
        %856 = vmatprep.subr.bf16.mxu0 0
        %857 = vmatpush1.bf16.msra.mxu0 %v822
        %858 = vmatprep.subr.bf16.mxu0 0
        %859 = vmatpush1.bf16.msra.mxu0 %v821
        %860 = vmatprep.subr.bf16.mxu0 0
        %861 = vmatpush1.bf16.msra.mxu0 %v820
        %862 = vmatprep.subr.bf16.mxu0 0
        %863 = vmatpush1.bf16.msra.mxu0 %v819
        %864 = vmatprep.subr.bf16.mxu0 0
        %865 = vmatpush1.bf16.msra.mxu0 %v818
        %866 = vmatprep.subr.bf16.mxu0 0
        %867 = vmatpush2.bf16.msra.mxu0 %v833
        %868 = vmatprep.subr.bf16.mxu0 0
        %869 = vmatpush2.bf16.msra.mxu0 %v832
        %870 = vmatprep.subr.bf16.mxu0 0
        %871 = vmatpush2.bf16.msra.mxu0 %v831
        %872 = vmatprep.subr.bf16.mxu0 0
        %873 = vmatpush2.bf16.msra.mxu0 %v830
        %874 = vmatprep.subr.bf16.mxu0 0
        %875 = vmatpush2.bf16.msra.mxu0 %v829
        %876 = vmatprep.subr.bf16.mxu0 0
        %877 = vmatpush2.bf16.msra.mxu0 %v828
        %878 = vmatprep.subr.bf16.mxu0 0
        %879 = vmatpush2.bf16.msra.mxu0 %v827
        %880 = vmatprep.subr.bf16.mxu0 0
        %881 = vmatpush2.bf16.msra.mxu0 %v826
        %882 = vmatprep.mubr.bf16.mxu0 %v753
        %883 = vmatmul.mubr.bf16.gmra.mxu0 %v752
        %v884 = vpop.f32.mrf.mxu0
        %v885 = vadd.f32 0.0, %v884
        %v886 = vpop.f32.mrf.mxu0
        %v887 = vpop.f32.mrf.mxu0
        %v888 = vpop.f32.mrf.mxu0
        %889 = vdwg.mxu0
        %vm890 = vcmask 1048064
        %891 = vrot.lane.b32.xlu0 %v885, 64
        %v892 = vpop.permute.xlu0 %891
        %v893 = vsel %vm890, %v892, %v885
        %894 = vrot.lane.b32.xlu0 %v893, 64
        %v895 = vpop.permute.xlu0 %894
        %v896 = vsel %vm890, %v895, %v885
        %v897 = vld [vmem:[%s4 + $0x10] ss:$0 sm:$0xff]
        %899 = vrot.lane.b32.xlu0 %v897, 55
        %v900 = vpop.permute.xlu0 %899
        %v902 = vmul.f32 %v896, %v900
        %v903 = vld [vmem:[%s4 + $0x11] ss:$0 sm:$0xff]
        %905 = vrot.lane.b32.xlu0 %v903, 56
        %v906 = vpop.permute.xlu0 %905
        %v908 = vmul.f32 %v896, %v906
        %v909 = vld [vmem:[%s4 + $0x12] ss:$0 sm:$0xff]
        %911 = vrot.lane.b32.xlu0 %v909, 57
        %v912 = vpop.permute.xlu0 %911
        %v914 = vmul.f32 %v896, %v912
        %v915 = vld [vmem:[%s4 + $0x13] ss:$0 sm:$0xff]
        %917 = vrot.lane.b32.xlu0 %v915, 63
        %v918 = vpop.permute.xlu0 %917
        %v920 = vmul.f32 %v896, %v918
        %v921 = vld [vmem:[%s4 + $0x14] ss:$0 sm:$0xff]
        %923 = vrot.lane.b32.xlu0 %v921, 1
        %v924 = vpop.permute.xlu0 %923
        %v926 = vmul.f32 %v896, %v924
        %v927 = vld [vmem:[%s4 + $0x15] ss:$0 sm:$0xff]
        %929 = vrot.lane.b32.xlu0 %v927, 7
        %v930 = vpop.permute.xlu0 %929
        %v932 = vmul.f32 %v896, %v930
        %v933 = vld [vmem:[%s4 + $0x16] ss:$0 sm:$0xff]
        %935 = vrot.lane.b32.xlu0 %v933, 8
        %v936 = vpop.permute.xlu0 %935
        %v938 = vmul.f32 %v896, %v936
        %v939 = vld [vmem:[%s4 + $0x17] ss:$0 sm:$0xff]
        %941 = vrot.lane.b32.xlu0 %v939, 9
        %v942 = vpop.permute.xlu0 %941
        %v944 = vmul.f32 %v896, %v942
        %946 = vrot.lane.b32.xlu0 %v908, 127
        %v947 = vpop.permute.xlu0 %946
        %950 = vrot.lane.b32.xlu0 %v914, 126
        %v951 = vpop.permute.xlu0 %950
        %954 = vrot.lane.b32.xlu0 %v920, 120
        %v955 = vpop.permute.xlu0 %954
        %958 = vrot.lane.b32.xlu0 %v885, 55
        %v959 = vpop.permute.xlu0 %958
        %962 = vrot.lane.b32.xlu0 %v926, 54
        %v963 = vpop.permute.xlu0 %962
        %966 = vrot.lane.b32.xlu0 %v932, 48
        %v967 = vpop.permute.xlu0 %966
        %970 = vrot.lane.b32.xlu0 %v938, 47
        %v971 = vpop.permute.xlu0 %970
        %974 = vrot.lane.b32.xlu0 %v944, 46
        %v975 = vpop.permute.xlu0 %974
        %v977 = vpack.c.bf16 %v947, %v902
        %v978 = vpack.c.bf16 %v955, %v951
        %v979 = vpack.c.bf16 %v963, %v959
        %v980 = vpack.c.bf16 %v971, %v967
        %v981 = vpack.c.bf16 %v975, %v975
        %v982 = vld [vmem:[#allocation2 + $0x120] sm:$0xf]
        %v983 = vld [vmem:[#allocation2 + $0x128] sm:$0xf]
        %v984 = vld [vmem:[#allocation2 + $0x130] sm:$0xf]
        %v985 = vld [vmem:[#allocation2 + $0x138] sm:$0xf]
        %v990 = vunpack.c.l.b16 %v982
        %v991 = vunpack.c.l.b16 %v983
        %v992 = vunpack.c.l.b16 %v984
        %v993 = vunpack.c.l.b16 %v985
        %v994 = vpack.c.b16 %v991, %v990
        %v995 = vpack.c.b16 %v993, %v992
        %1001 = vrot.lane.b32.xlu0 %v977, 73
        %v1002 = vpop.permute.xlu0 %1001
        %1003 = vrot.lane.b32.xlu0 %v978, 73
        %v1004 = vpop.permute.xlu0 %1003
        %1005 = vrot.lane.b32.xlu0 %v979, 73
        %v1006 = vpop.permute.xlu0 %1005
        %1007 = vrot.lane.b32.xlu0 %v980, 73
        %v1008 = vpop.permute.xlu0 %1007
        %1009 = vrot.lane.b32.xlu0 %v981, 73
        %v1010 = vpop.permute.xlu0 %1009
        %v1016 = vsel %vm513, %v994, 0
        %v1019 = vsel %vm513, %v995, 0
        %v1022 = vsel %vm517, %v1010, 0
        %1024 = vmatprep.subr.bf16.mxu0 0
        %1025 = vmatpush1.bf16.msra.mxu0 0
        %1026 = vmatprep.subr.bf16.mxu0 0
        %1027 = vmatpush1.bf16.msra.mxu0 0
        %1028 = vmatprep.subr.bf16.mxu0 0
        %1029 = vmatpush1.bf16.msra.mxu0 0
        %1030 = vmatprep.subr.bf16.mxu0 0
        %1031 = vmatpush1.bf16.msra.mxu0 %v1022
        %1032 = vmatprep.subr.bf16.mxu0 0
        %1033 = vmatpush1.bf16.msra.mxu0 %v1008
        %1034 = vmatprep.subr.bf16.mxu0 0
        %1035 = vmatpush1.bf16.msra.mxu0 %v1006
        %1036 = vmatprep.subr.bf16.mxu0 0
        %1037 = vmatpush1.bf16.msra.mxu0 %v1004
        %1038 = vmatprep.subr.bf16.mxu0 0
        %1039 = vmatpush1.bf16.msra.mxu0 %v1002
        %1040 = vmatprep.subr.bf16.mxu0 0
        %1041 = vmatpush2.bf16.msra.mxu0 0
        %1042 = vmatprep.subr.bf16.mxu0 0
        %1043 = vmatpush2.bf16.msra.mxu0 0
        %1044 = vmatprep.subr.bf16.mxu0 0
        %1045 = vmatpush2.bf16.msra.mxu0 0
        %1046 = vmatprep.subr.bf16.mxu0 0
        %1047 = vmatpush2.bf16.msra.mxu0 0
        %1048 = vmatprep.subr.bf16.mxu0 0
        %1049 = vmatpush2.bf16.msra.mxu0 0
        %1050 = vmatprep.subr.bf16.mxu0 0
        %1051 = vmatpush2.bf16.msra.mxu0 0
        %1052 = vmatprep.subr.bf16.mxu0 0
        %1053 = vmatpush2.bf16.msra.mxu0 0
        %1054 = vmatprep.subr.bf16.mxu0 0
        %1055 = vmatpush2.bf16.msra.mxu0 0
        %1056 = vmatprep.mubr.bf16.mxu0 0
        %1057 = vmatmul.mubr.bf16.gmra.mxu0 %v1016
        %v1058 = vpop.f32.mrf.mxu0
        %v1059 = vadd.f32 0.0, %v1058
        %v1060 = vpop.f32.mrf.mxu0
        %v1061 = vpop.f32.mrf.mxu0
        %v1062 = vadd.f32 0.0, %v1061
        %v1063 = vpop.f32.mrf.mxu0
        %1064 = vmatprep.mubr.bf16.mxu0 0
        %1065 = vmatmul.mubr.bf16.gmra.mxu0 %v1019
        %v1066 = vpop.f32.mrf.mxu0
        %v1067 = vadd.f32 0.0, %v1066
        %v1068 = vpop.f32.mrf.mxu0
        %v1069 = vpop.f32.mrf.mxu0
        %v1070 = vadd.f32 0.0, %v1069
        %v1071 = vpop.f32.mrf.mxu0
        %1072 = vdwg.mxu0
        %v1073 = vld [vmem:[%s3] sm:$0xff]
        %v1074 = vld [vmem:[%s3 + $0x8] sm:$0xff]
        %1076 = vset.pattern.permute.xlu0 4
        %1077 = vperm.xlu0 %1076, %v1073
        %v1078 = vpop.permute.xlu0 %1077
        %1081 = vset.pattern.permute.xlu0 4
        %1082 = vperm.xlu0 %1081, %v1074
        %v1083 = vpop.permute.xlu0 %1082
        %v1085 = vadd.f32 %v1059, %v1078
        %v1086 = vadd.f32 %v1062, %v1083
        %1087 = vset.pattern.permute.xlu0 5
        %1088 = vperm.xlu0 %1087, %v1073
        %v1089 = vpop.permute.xlu0 %1088
        %1091 = vset.pattern.permute.xlu0 5
        %1092 = vperm.xlu0 %1091, %v1074
        %v1093 = vpop.permute.xlu0 %1092
        %v1095 = vadd.f32 %v1067, %v1089
        %v1096 = vadd.f32 %v1070, %v1093
        %v1097 = vmul.f32 %v1085, 0.2
        %v1098 = vmul.f32 %v1086, 0.2
        %v1099 = vmax.f32 %v1085, %v1097
        %v1100 = vmax.f32 %v1086, %v1098
        %v1101 = vadd.f32 %v1099, %v1095
        %v1102 = vadd.f32 %v1100, %v1096
        %1103 = vrot.lane.b32.xlu0 %v1101, 64
        %v1104 = vpop.permute.xlu0 %1103
        %v1105 = vsel %vm890, %v1104, %v1101
        %1106 = vrot.lane.b32.xlu0 %v1102, 64
        %v1107 = vpop.permute.xlu0 %1106
        %v1108 = vsel %vm890, %v1107, %v1102
        %1109 = vrot.lane.b32.xlu0 %v1105, 64
        %v1110 = vpop.permute.xlu0 %1109
        %1111 = vrot.lane.b32.xlu0 %v1108, 64
        %v1112 = vpop.permute.xlu0 %1111
        %v1113 = vsel %vm890, %v1110, %v1101
        %v1114 = vsel %vm890, %v1112, %v1102
        %v1115 = vmul.f32 %v1113, %v900
        %v1116 = vmul.f32 %v1114, %v900
        %v1117 = vmul.f32 %v1113, %v906
        %v1118 = vmul.f32 %v1114, %v906
        %v1119 = vmul.f32 %v1113, %v912
        %v1120 = vmul.f32 %v1114, %v912
        %v1121 = vmul.f32 %v1113, %v918
        %v1122 = vmul.f32 %v1114, %v918
        %v1123 = vmul.f32 %v1113, %v924
        %v1124 = vmul.f32 %v1114, %v924
        %v1125 = vmul.f32 %v1113, %v930
        %v1126 = vmul.f32 %v1114, %v930
        %v1127 = vmul.f32 %v1113, %v936
        %v1128 = vmul.f32 %v1114, %v936
        %v1129 = vmul.f32 %v1113, %v942
        %v1130 = vmul.f32 %v1114, %v942
        %1133 = vrot.lane.b32.xlu0 %v1117, 127
        %v1134 = vpop.permute.xlu0 %1133
        %1135 = vrot.lane.b32.xlu0 %v1118, 127
        %v1136 = vpop.permute.xlu0 %1135
        %1141 = vrot.lane.b32.xlu0 %v1119, 126
        %v1142 = vpop.permute.xlu0 %1141
        %1143 = vrot.lane.b32.xlu0 %v1120, 126
        %v1144 = vpop.permute.xlu0 %1143
        %1149 = vrot.lane.b32.xlu0 %v1121, 120
        %v1150 = vpop.permute.xlu0 %1149
        %1151 = vrot.lane.b32.xlu0 %v1122, 120
        %v1152 = vpop.permute.xlu0 %1151
        %1157 = vrot.lane.b32.xlu0 %v1101, 55
        %v1158 = vpop.permute.xlu0 %1157
        %1159 = vrot.lane.b32.xlu0 %v1102, 55
        %v1160 = vpop.permute.xlu0 %1159
        %1165 = vrot.lane.b32.xlu0 %v1123, 54
        %v1166 = vpop.permute.xlu0 %1165
        %1167 = vrot.lane.b32.xlu0 %v1124, 54
        %v1168 = vpop.permute.xlu0 %1167
        %1173 = vrot.lane.b32.xlu0 %v1125, 48
        %v1174 = vpop.permute.xlu0 %1173
        %1175 = vrot.lane.b32.xlu0 %v1126, 48
        %v1176 = vpop.permute.xlu0 %1175
        %1181 = vrot.lane.b32.xlu0 %v1127, 47
        %v1182 = vpop.permute.xlu0 %1181
        %1183 = vrot.lane.b32.xlu0 %v1128, 47
        %v1184 = vpop.permute.xlu0 %1183
        %1189 = vrot.lane.b32.xlu0 %v1129, 46
        %v1190 = vpop.permute.xlu0 %1189
        %1191 = vrot.lane.b32.xlu0 %v1130, 46
        %v1192 = vpop.permute.xlu0 %1191
        %v1195 = vpack.c.bf16 %v1116, %v1115
        %v1196 = vpack.c.bf16 %v1136, %v1134
        %v1197 = vpack.c.bf16 %v1144, %v1142
        %v1198 = vpack.c.bf16 %v1152, %v1150
        %v1199 = vpack.c.bf16 %v1160, %v1158
        %v1200 = vpack.c.bf16 %v1168, %v1166
        %v1201 = vpack.c.bf16 %v1176, %v1174
        %v1202 = vpack.c.bf16 %v1184, %v1182
        %v1203 = vpack.c.bf16 %v1192, %v1190
        %v1204 = vld [vmem:[#allocation2 + $0x140] sm:$0xff]
        %v1205 = vld [vmem:[#allocation2 + $0x148] sm:$0xff]
        %1206 = vset.pattern.permute.xlu0 6
        %1207 = vperm.xlu0 %1206, %v1073
        %v1208 = vpop.permute.xlu0 %1207
        %1210 = vset.pattern.permute.xlu0 6
        %1211 = vperm.xlu0 %1210, %v1074
        %v1212 = vpop.permute.xlu0 %1211
        %v1216 = vunpack.c.l.b16 %v1204
        %v1217 = vunpack.c.h.b16 %v1204
        %v1218 = vunpack.c.l.b16 %v1205
        %v1219 = vunpack.c.h.b16 %v1205
        %v1220 = vpack.c.b16 %v1218, %v1216
        %v1221 = vpack.c.b16 %v1219, %v1217
        %1232 = vrot.lane.b32.xlu0 %v1195, 73
        %v1233 = vpop.permute.xlu0 %1232
        %1234 = vrot.lane.b32.xlu0 %v1196, 73
        %v1235 = vpop.permute.xlu0 %1234
        %1236 = vrot.lane.b32.xlu0 %v1197, 73
        %v1237 = vpop.permute.xlu0 %1236
        %1238 = vrot.lane.b32.xlu0 %v1198, 73
        %v1239 = vpop.permute.xlu0 %1238
        %1240 = vrot.lane.b32.xlu0 %v1199, 73
        %v1241 = vpop.permute.xlu0 %1240
        %1242 = vrot.lane.b32.xlu0 %v1200, 73
        %v1243 = vpop.permute.xlu0 %1242
        %1244 = vrot.lane.b32.xlu0 %v1201, 73
        %v1245 = vpop.permute.xlu0 %1244
        %1246 = vrot.lane.b32.xlu0 %v1202, 73
        %v1247 = vpop.permute.xlu0 %1246
        %1248 = vrot.lane.b32.xlu0 %v1203, 73
        %v1249 = vpop.permute.xlu0 %1248
        %vm1259 = vcmask 130048
        %v1261 = vsel %vm1259, %v1221, 0
        %1263 = vmatprep.subr.bf16.mxu0 0
        %1264 = vmatpush1.bf16.msra.mxu0 %v1247
        %1265 = vmatprep.subr.bf16.mxu0 0
        %1266 = vmatpush1.bf16.msra.mxu0 %v1245
        %1267 = vmatprep.subr.bf16.mxu0 0
        %1268 = vmatpush1.bf16.msra.mxu0 %v1243
        %1269 = vmatprep.subr.bf16.mxu0 0
        %1270 = vmatpush1.bf16.msra.mxu0 %v1241
        %1271 = vmatprep.subr.bf16.mxu0 0
        %1272 = vmatpush1.bf16.msra.mxu0 %v1239
        %1273 = vmatprep.subr.bf16.mxu0 0
        %1274 = vmatpush1.bf16.msra.mxu0 %v1237
        %1275 = vmatprep.subr.bf16.mxu0 0
        %1276 = vmatpush1.bf16.msra.mxu0 %v1235
        %1277 = vmatprep.subr.bf16.mxu0 0
        %1278 = vmatpush1.bf16.msra.mxu0 %v1233
        %1279 = vmatprep.subr.bf16.mxu0 0
        %1280 = vmatpush2.bf16.msra.mxu0 0
        %1281 = vmatprep.subr.bf16.mxu0 0
        %1282 = vmatpush2.bf16.msra.mxu0 0
        %1283 = vmatprep.subr.bf16.mxu0 0
        %1284 = vmatpush2.bf16.msra.mxu0 0
        %1285 = vmatprep.subr.bf16.mxu0 0
        %1286 = vmatpush2.bf16.msra.mxu0 0
        %1287 = vmatprep.subr.bf16.mxu0 0
        %1288 = vmatpush2.bf16.msra.mxu0 0
        %1289 = vmatprep.subr.bf16.mxu0 0
        %1290 = vmatpush2.bf16.msra.mxu0 0
        %1291 = vmatprep.subr.bf16.mxu0 0
        %1292 = vmatpush2.bf16.msra.mxu0 0
        %1293 = vmatprep.subr.bf16.mxu0 0
        %1294 = vmatpush2.bf16.msra.mxu0 %v1249
        %1295 = vmatprep.mubr.bf16.mxu0 %v1261
        %1296 = vmatmul.mubr.bf16.gmra.mxu0 %v1220
        %v1297 = vpop.f32.mrf.mxu0
        %v1298 = vadd.f32 %v1208, %v1297
        %v1299 = vpop.f32.mrf.mxu0
        %v1300 = vpop.f32.mrf.mxu0
        %v1301 = vadd.f32 %v1212, %v1300
        %v1302 = vpop.f32.mrf.mxu0
        %1303 = vdwg.mxu0
        %v1304 = vmul.f32 %v1298, 0.2
        %v1305 = vmul.f32 %v1301, 0.2
        %v1306 = vmax.f32 %v1298, %v1304
        %v1307 = vmax.f32 %v1301, %v1305
        %v1308 = vadd.f32 %v1306, %v1101
        %v1309 = vadd.f32 %v1307, %v1102
        %v1310 = vld [vmem:[#allocation2 + $0x150] sm:$0xf]
        %v1311 = vld [vmem:[#allocation2 + $0x158] sm:$0xf]
        %v1312 = vld [vmem:[#allocation2 + $0x160] sm:$0xf]
        %v1313 = vld [vmem:[#allocation2 + $0x168] sm:$0xf]
        %v1314 = vld [vmem:[#allocation2 + $0x170] sm:$0xf]
        %v1315 = vld [vmem:[#allocation2 + $0x178] sm:$0xf]
        %v1316 = vld [vmem:[#allocation2 + $0x180] sm:$0xf]
        %v1317 = vld [vmem:[#allocation2 + $0x188] sm:$0xf]
        %v1318 = vpack.c.bf16 %v1309, %v1308
        %v1327 = vunpack.c.l.b16 %v1310
        %v1328 = vunpack.c.l.b16 %v1311
        %v1329 = vunpack.c.l.b16 %v1312
        %v1330 = vunpack.c.l.b16 %v1313
        %v1331 = vunpack.c.l.b16 %v1314
        %v1332 = vunpack.c.l.b16 %v1315
        %v1333 = vunpack.c.l.b16 %v1316
        %v1334 = vunpack.c.l.b16 %v1317
        %v1335 = vpack.c.b16 %v1328, %v1327
        %v1336 = vpack.c.b16 %v1330, %v1329
        %v1337 = vpack.c.b16 %v1332, %v1331
        %v1338 = vpack.c.b16 %v1334, %v1333
        %vm1343 = vcmask 523264
        %v1345 = vsel %vm1343, %v1318, 0
        %1347 = vmatprep.subr.bf16.mxu0 0
        %1348 = vmatpush1.bf16.msra.mxu0 0
        %1349 = vmatprep.subr.bf16.mxu0 0
        %1350 = vmatpush1.bf16.msra.mxu0 0
        %1351 = vmatprep.subr.bf16.mxu0 0
        %1352 = vmatpush1.bf16.msra.mxu0 0
        %1353 = vmatprep.subr.bf16.mxu0 0
        %1354 = vmatpush1.bf16.msra.mxu0 0
        %1355 = vmatprep.subr.bf16.mxu0 0
        %1356 = vmatpush1.bf16.msra.mxu0 %v1338
        %1357 = vmatprep.subr.bf16.mxu0 0
        %1358 = vmatpush1.bf16.msra.mxu0 %v1337
        %1359 = vmatprep.subr.bf16.mxu0 0
        %1360 = vmatpush1.bf16.msra.mxu0 %v1336
        %1361 = vmatprep.subr.bf16.mxu0 0
        %1362 = vmatpush1.bf16.msra.mxu0 %v1335
        %1363 = vmatprep.subr.bf16.mxu0 0
        %1364 = vmatpush2.bf16.msra.mxu0 0
        %1365 = vmatprep.subr.bf16.mxu0 0
        %1366 = vmatpush2.bf16.msra.mxu0 0
        %1367 = vmatprep.subr.bf16.mxu0 0
        %1368 = vmatpush2.bf16.msra.mxu0 0
        %1369 = vmatprep.subr.bf16.mxu0 0
        %1370 = vmatpush2.bf16.msra.mxu0 0
        %1371 = vmatprep.subr.bf16.mxu0 0
        %1372 = vmatpush2.bf16.msra.mxu0 0
        %1373 = vmatprep.subr.bf16.mxu0 0
        %1374 = vmatpush2.bf16.msra.mxu0 0
        %1375 = vmatprep.subr.bf16.mxu0 0
        %1376 = vmatpush2.bf16.msra.mxu0 0
        %1377 = vmatprep.subr.bf16.mxu0 0
        %1378 = vmatpush2.bf16.msra.mxu0 0
        %1379 = vmatprep.mubr.bf16.mxu0 0
        %1380 = vmatmul.mubr.bf16.gmra.mxu0 %v1345
        %v1381 = vpop.f32.mrf.mxu0
        %v1382 = vadd.f32 0.0, %v1381
        %v1383 = vpop.f32.mrf.mxu0
        %v1384 = vpop.f32.mrf.mxu0
        %v1385 = vadd.f32 0.0, %v1384
        %v1386 = vpop.f32.mrf.mxu0
        %1387 = vdwg.mxu0
        %vm1388 = vcmask 1047680
        %1389 = vrot.lane.b32.xlu0 %v1382, 16
        %v1390 = vpop.permute.xlu0 %1389
        %v1391 = vsel %vm1388, %v1390, %v1382
        %1392 = vrot.lane.b32.xlu0 %v1385, 16
        %v1393 = vpop.permute.xlu0 %1392
        %v1394 = vsel %vm1388, %v1393, %v1385
        %1395 = vrot.lane.b32.xlu0 %v1391, 16
        %v1396 = vpop.permute.xlu0 %1395
        %1397 = vrot.lane.b32.xlu0 %v1394, 16
        %v1398 = vpop.permute.xlu0 %1397
        %v1399 = vsel %vm1388, %v1396, %v1382
        %v1400 = vsel %vm1388, %v1398, %v1385
        %v1401 = vld [vmem:[%s4 + $0x20] ss:$0 sm:$0xff]
        %1403 = vrot.lane.b32.xlu0 %v1401, 11
        %v1404 = vpop.permute.xlu0 %1403
        %v1406 = vmul.f32 %v1399, %v1404
        %v1407 = vmul.f32 %v1400, %v1404
        %v1408 = vld [vmem:[%s4 + $0x21] ss:$0 sm:$0xff]
        %1410 = vrot.lane.b32.xlu0 %v1408, 12
        %v1411 = vpop.permute.xlu0 %1410
        %v1413 = vmul.f32 %v1399, %v1411
        %v1414 = vmul.f32 %v1400, %v1411
        %v1415 = vld [vmem:[%s4 + $0x22] ss:$0 sm:$0xff]
        %1417 = vrot.lane.b32.xlu0 %v1415, 13
        %v1418 = vpop.permute.xlu0 %1417
        %v1420 = vmul.f32 %v1399, %v1418
        %v1421 = vmul.f32 %v1400, %v1418
        %v1422 = vld [vmem:[%s4 + $0x23] ss:$0 sm:$0xff]
        %1424 = vrot.lane.b32.xlu0 %v1422, 15
        %v1425 = vpop.permute.xlu0 %1424
        %v1427 = vmul.f32 %v1399, %v1425
        %v1428 = vmul.f32 %v1400, %v1425
        %v1429 = vld [vmem:[%s4 + $0x24] ss:$0 sm:$0xff]
        %1431 = vrot.lane.b32.xlu0 %v1429, 1
        %v1432 = vpop.permute.xlu0 %1431
        %v1434 = vmul.f32 %v1399, %v1432
        %v1435 = vmul.f32 %v1400, %v1432
        %v1436 = vld [vmem:[%s4 + $0x25] ss:$0 sm:$0xff]
        %1438 = vrot.lane.b32.xlu0 %v1436, 3
        %v1439 = vpop.permute.xlu0 %1438
        %v1441 = vmul.f32 %v1399, %v1439
        %v1442 = vmul.f32 %v1400, %v1439
        %v1443 = vld [vmem:[%s4 + $0x26] ss:$0 sm:$0xff]
        %1445 = vrot.lane.b32.xlu0 %v1443, 4
        %v1446 = vpop.permute.xlu0 %1445
        %v1448 = vmul.f32 %v1399, %v1446
        %v1449 = vmul.f32 %v1400, %v1446
        %v1450 = vld [vmem:[%s4 + $0x27] ss:$0 sm:$0xff]
        %1452 = vrot.lane.b32.xlu0 %v1450, 5
        %v1453 = vpop.permute.xlu0 %1452
        %v1455 = vmul.f32 %v1399, %v1453
        %v1456 = vmul.f32 %v1400, %v1453
        %1459 = vrot.lane.b32.xlu0 %v1413, 127
        %v1460 = vpop.permute.xlu0 %1459
        %1461 = vrot.lane.b32.xlu0 %v1414, 127
        %v1462 = vpop.permute.xlu0 %1461
        %1467 = vrot.lane.b32.xlu0 %v1420, 126
        %v1468 = vpop.permute.xlu0 %1467
        %1469 = vrot.lane.b32.xlu0 %v1421, 126
        %v1470 = vpop.permute.xlu0 %1469
        %1475 = vrot.lane.b32.xlu0 %v1427, 124
        %v1476 = vpop.permute.xlu0 %1475
        %1477 = vrot.lane.b32.xlu0 %v1428, 124
        %v1478 = vpop.permute.xlu0 %1477
        %1483 = vrot.lane.b32.xlu0 %v1382, 11
        %v1484 = vpop.permute.xlu0 %1483
        %1485 = vrot.lane.b32.xlu0 %v1385, 11
        %v1486 = vpop.permute.xlu0 %1485
        %1491 = vrot.lane.b32.xlu0 %v1434, 10
        %v1492 = vpop.permute.xlu0 %1491
        %1493 = vrot.lane.b32.xlu0 %v1435, 10
        %v1494 = vpop.permute.xlu0 %1493
        %1499 = vrot.lane.b32.xlu0 %v1441, 8
        %v1500 = vpop.permute.xlu0 %1499
        %1501 = vrot.lane.b32.xlu0 %v1442, 8
        %v1502 = vpop.permute.xlu0 %1501
        %1507 = vrot.lane.b32.xlu0 %v1448, 7
        %v1508 = vpop.permute.xlu0 %1507
        %1509 = vrot.lane.b32.xlu0 %v1449, 7
        %v1510 = vpop.permute.xlu0 %1509
        %1515 = vrot.lane.b32.xlu0 %v1455, 6
        %v1516 = vpop.permute.xlu0 %1515
        %1517 = vrot.lane.b32.xlu0 %v1456, 6
        %v1518 = vpop.permute.xlu0 %1517
        %v1521 = vpack.c.bf16 %v1407, %v1406
        %v1522 = vpack.c.bf16 %v1462, %v1460
        %v1523 = vpack.c.bf16 %v1470, %v1468
        %v1524 = vpack.c.bf16 %v1478, %v1476
        %v1525 = vpack.c.bf16 %v1486, %v1484
        %v1526 = vpack.c.bf16 %v1494, %v1492
        %v1527 = vpack.c.bf16 %v1502, %v1500
        %v1528 = vpack.c.bf16 %v1510, %v1508
        %v1529 = vpack.c.bf16 %v1518, %v1516
        %v1530 = vld [vmem:[#allocation2 + $0x190] sm:$0xff]
        %v1531 = vld [vmem:[#allocation2 + $0x198] sm:$0xff]
        %1532 = vset.pattern.permute.xlu0 7
        %1533 = vperm.xlu0 %1532, %v1073
        %v1534 = vpop.permute.xlu0 %1533
        %1536 = vset.pattern.permute.xlu0 7
        %1537 = vperm.xlu0 %1536, %v1074
        %v1538 = vpop.permute.xlu0 %1537
        %v1542 = vunpack.c.l.b16 %v1530
        %v1543 = vunpack.c.h.b16 %v1530
        %v1544 = vunpack.c.l.b16 %v1531
        %v1545 = vunpack.c.h.b16 %v1531
        %v1546 = vpack.c.b16 %v1544, %v1542
        %v1547 = vpack.c.b16 %v1545, %v1543
        %1558 = vrot.lane.b32.xlu0 %v1521, 117
        %v1559 = vpop.permute.xlu0 %1558
        %1560 = vrot.lane.b32.xlu0 %v1522, 117
        %v1561 = vpop.permute.xlu0 %1560
        %1562 = vrot.lane.b32.xlu0 %v1523, 117
        %v1563 = vpop.permute.xlu0 %1562
        %1564 = vrot.lane.b32.xlu0 %v1524, 117
        %v1565 = vpop.permute.xlu0 %1564
        %1566 = vrot.lane.b32.xlu0 %v1525, 117
        %v1567 = vpop.permute.xlu0 %1566
        %1568 = vrot.lane.b32.xlu0 %v1526, 117
        %v1569 = vpop.permute.xlu0 %1568
        %1570 = vrot.lane.b32.xlu0 %v1527, 117
        %v1571 = vpop.permute.xlu0 %1570
        %1572 = vrot.lane.b32.xlu0 %v1528, 117
        %v1573 = vpop.permute.xlu0 %1572
        %1574 = vrot.lane.b32.xlu0 %v1529, 117
        %v1575 = vpop.permute.xlu0 %1574
        %v1586 = vsel %vm1259, %v1547, 0
        %1588 = vmatprep.subr.bf16.mxu0 0
        %1589 = vmatpush1.bf16.msra.mxu0 %v1573
        %1590 = vmatprep.subr.bf16.mxu0 0
        %1591 = vmatpush1.bf16.msra.mxu0 %v1571
        %1592 = vmatprep.subr.bf16.mxu0 0
        %1593 = vmatpush1.bf16.msra.mxu0 %v1569
        %1594 = vmatprep.subr.bf16.mxu0 0
        %1595 = vmatpush1.bf16.msra.mxu0 %v1567
        %1596 = vmatprep.subr.bf16.mxu0 0
        %1597 = vmatpush1.bf16.msra.mxu0 %v1565
        %1598 = vmatprep.subr.bf16.mxu0 0
        %1599 = vmatpush1.bf16.msra.mxu0 %v1563
        %1600 = vmatprep.subr.bf16.mxu0 0
        %1601 = vmatpush1.bf16.msra.mxu0 %v1561
        %1602 = vmatprep.subr.bf16.mxu0 0
        %1603 = vmatpush1.bf16.msra.mxu0 %v1559
        %1604 = vmatprep.subr.bf16.mxu0 0
        %1605 = vmatpush2.bf16.msra.mxu0 0
        %1606 = vmatprep.subr.bf16.mxu0 0
        %1607 = vmatpush2.bf16.msra.mxu0 0
        %1608 = vmatprep.subr.bf16.mxu0 0
        %1609 = vmatpush2.bf16.msra.mxu0 0
        %1610 = vmatprep.subr.bf16.mxu0 0
        %1611 = vmatpush2.bf16.msra.mxu0 0
        %1612 = vmatprep.subr.bf16.mxu0 0
        %1613 = vmatpush2.bf16.msra.mxu0 0
        %1614 = vmatprep.subr.bf16.mxu0 0
        %1615 = vmatpush2.bf16.msra.mxu0 0
        %1616 = vmatprep.subr.bf16.mxu0 0
        %1617 = vmatpush2.bf16.msra.mxu0 0
        %1618 = vmatprep.subr.bf16.mxu0 0
        %1619 = vmatpush2.bf16.msra.mxu0 %v1575
        %1620 = vmatprep.mubr.bf16.mxu0 %v1586
        %1621 = vmatmul.mubr.bf16.gmra.mxu0 %v1546
        %v1622 = vpop.f32.mrf.mxu0
        %v1623 = vadd.f32 %v1534, %v1622
        %v1624 = vpop.f32.mrf.mxu0
        %v1625 = vpop.f32.mrf.mxu0
        %v1626 = vadd.f32 %v1538, %v1625
        %v1627 = vpop.f32.mrf.mxu0
        %1628 = vdwg.mxu0
        %v1629 = vmul.f32 %v1623, 0.2
        %v1630 = vmul.f32 %v1626, 0.2
        %v1631 = vmax.f32 %v1623, %v1629
        %v1632 = vmax.f32 %v1626, %v1630
        %v1633 = vadd.f32 %v1631, %v1382
        %v1634 = vadd.f32 %v1632, %v1385
        %1635 = vrot.lane.b32.xlu0 %v1633, 16
        %v1636 = vpop.permute.xlu0 %1635
        %v1637 = vsel %vm1388, %v1636, %v1633
        %1638 = vrot.lane.b32.xlu0 %v1634, 16
        %v1639 = vpop.permute.xlu0 %1638
        %v1640 = vsel %vm1388, %v1639, %v1634
        %1641 = vrot.lane.b32.xlu0 %v1637, 16
        %v1642 = vpop.permute.xlu0 %1641
        %1643 = vrot.lane.b32.xlu0 %v1640, 16
        %v1644 = vpop.permute.xlu0 %1643
        %v1645 = vsel %vm1388, %v1642, %v1633
        %v1646 = vsel %vm1388, %v1644, %v1634
        %v1647 = vmul.f32 %v1645, %v1404
        %v1648 = vmul.f32 %v1646, %v1404
        %v1649 = vmul.f32 %v1645, %v1411
        %v1650 = vmul.f32 %v1646, %v1411
        %v1651 = vmul.f32 %v1645, %v1418
        %v1652 = vmul.f32 %v1646, %v1418
        %v1653 = vmul.f32 %v1645, %v1425
        %v1654 = vmul.f32 %v1646, %v1425
        %v1655 = vmul.f32 %v1645, %v1432
        %v1656 = vmul.f32 %v1646, %v1432
        %v1657 = vmul.f32 %v1645, %v1439
        %v1658 = vmul.f32 %v1646, %v1439
        %v1659 = vmul.f32 %v1645, %v1446
        %v1660 = vmul.f32 %v1646, %v1446
        %v1661 = vmul.f32 %v1645, %v1453
        %v1662 = vmul.f32 %v1646, %v1453
        %1665 = vrot.lane.b32.xlu0 %v1649, 127
        %v1666 = vpop.permute.xlu0 %1665
        %1667 = vrot.lane.b32.xlu0 %v1650, 127
        %v1668 = vpop.permute.xlu0 %1667
        %1673 = vrot.lane.b32.xlu0 %v1651, 126
        %v1674 = vpop.permute.xlu0 %1673
        %1675 = vrot.lane.b32.xlu0 %v1652, 126
        %v1676 = vpop.permute.xlu0 %1675
        %1681 = vrot.lane.b32.xlu0 %v1653, 124
        %v1682 = vpop.permute.xlu0 %1681
        %1683 = vrot.lane.b32.xlu0 %v1654, 124
        %v1684 = vpop.permute.xlu0 %1683
        %1689 = vrot.lane.b32.xlu0 %v1633, 11
        %v1690 = vpop.permute.xlu0 %1689
        %1691 = vrot.lane.b32.xlu0 %v1634, 11
        %v1692 = vpop.permute.xlu0 %1691
        %1697 = vrot.lane.b32.xlu0 %v1655, 10
        %v1698 = vpop.permute.xlu0 %1697
        %1699 = vrot.lane.b32.xlu0 %v1656, 10
        %v1700 = vpop.permute.xlu0 %1699
        %1705 = vrot.lane.b32.xlu0 %v1657, 8
        %v1706 = vpop.permute.xlu0 %1705
        %1707 = vrot.lane.b32.xlu0 %v1658, 8
        %v1708 = vpop.permute.xlu0 %1707
        %1713 = vrot.lane.b32.xlu0 %v1659, 7
        %v1714 = vpop.permute.xlu0 %1713
        %1715 = vrot.lane.b32.xlu0 %v1660, 7
        %v1716 = vpop.permute.xlu0 %1715
        %1721 = vrot.lane.b32.xlu0 %v1661, 6
        %v1722 = vpop.permute.xlu0 %1721
        %1723 = vrot.lane.b32.xlu0 %v1662, 6
        %v1724 = vpop.permute.xlu0 %1723
        %v1727 = vpack.c.bf16 %v1648, %v1647
        %v1728 = vpack.c.bf16 %v1668, %v1666
        %v1729 = vpack.c.bf16 %v1676, %v1674
        %v1730 = vpack.c.bf16 %v1684, %v1682
        %v1731 = vpack.c.bf16 %v1692, %v1690
        %v1732 = vpack.c.bf16 %v1700, %v1698
        %v1733 = vpack.c.bf16 %v1708, %v1706
        %v1734 = vpack.c.bf16 %v1716, %v1714
        %v1735 = vpack.c.bf16 %v1724, %v1722
        %v1736 = vld [vmem:[#allocation2 + $0x1a0] sm:$0xff]
        %v1737 = vld [vmem:[#allocation2 + $0x1a8] sm:$0xff]
        %1738 = vset.pattern.permute.xlu0 8
        %1739 = vperm.xlu0 %1738, %v1073
        %v1740 = vpop.permute.xlu0 %1739
        %1742 = vset.pattern.permute.xlu0 8
        %1743 = vperm.xlu0 %1742, %v1074
        %v1744 = vpop.permute.xlu0 %1743
        %v1748 = vunpack.c.l.b16 %v1736
        %v1749 = vunpack.c.h.b16 %v1736
        %v1750 = vunpack.c.l.b16 %v1737
        %v1751 = vunpack.c.h.b16 %v1737
        %v1752 = vpack.c.b16 %v1750, %v1748
        %v1753 = vpack.c.b16 %v1751, %v1749
        %1764 = vrot.lane.b32.xlu0 %v1727, 117
        %v1765 = vpop.permute.xlu0 %1764
        %1766 = vrot.lane.b32.xlu0 %v1728, 117
        %v1767 = vpop.permute.xlu0 %1766
        %1768 = vrot.lane.b32.xlu0 %v1729, 117
        %v1769 = vpop.permute.xlu0 %1768
        %1770 = vrot.lane.b32.xlu0 %v1730, 117
        %v1771 = vpop.permute.xlu0 %1770
        %1772 = vrot.lane.b32.xlu0 %v1731, 117
        %v1773 = vpop.permute.xlu0 %1772
        %1774 = vrot.lane.b32.xlu0 %v1732, 117
        %v1775 = vpop.permute.xlu0 %1774
        %1776 = vrot.lane.b32.xlu0 %v1733, 117
        %v1777 = vpop.permute.xlu0 %1776
        %1778 = vrot.lane.b32.xlu0 %v1734, 117
        %v1779 = vpop.permute.xlu0 %1778
        %1780 = vrot.lane.b32.xlu0 %v1735, 117
        %v1781 = vpop.permute.xlu0 %1780
        %v1792 = vsel %vm1259, %v1753, 0
        %1794 = vmatprep.subr.bf16.mxu0 0
        %1795 = vmatpush1.bf16.msra.mxu0 %v1779
        %1796 = vmatprep.subr.bf16.mxu0 0
        %1797 = vmatpush1.bf16.msra.mxu0 %v1777
        %1798 = vmatprep.subr.bf16.mxu0 0
        %1799 = vmatpush1.bf16.msra.mxu0 %v1775
        %1800 = vmatprep.subr.bf16.mxu0 0
        %1801 = vmatpush1.bf16.msra.mxu0 %v1773
        %1802 = vmatprep.subr.bf16.mxu0 0
        %1803 = vmatpush1.bf16.msra.mxu0 %v1771
        %1804 = vmatprep.subr.bf16.mxu0 0
        %1805 = vmatpush1.bf16.msra.mxu0 %v1769
        %1806 = vmatprep.subr.bf16.mxu0 0
        %1807 = vmatpush1.bf16.msra.mxu0 %v1767
        %1808 = vmatprep.subr.bf16.mxu0 0
        %1809 = vmatpush1.bf16.msra.mxu0 %v1765
        %1810 = vmatprep.subr.bf16.mxu0 0
        %1811 = vmatpush2.bf16.msra.mxu0 0
        %1812 = vmatprep.subr.bf16.mxu0 0
        %1813 = vmatpush2.bf16.msra.mxu0 0
        %1814 = vmatprep.subr.bf16.mxu0 0
        %1815 = vmatpush2.bf16.msra.mxu0 0
        %1816 = vmatprep.subr.bf16.mxu0 0
        %1817 = vmatpush2.bf16.msra.mxu0 0
        %1818 = vmatprep.subr.bf16.mxu0 0
        %1819 = vmatpush2.bf16.msra.mxu0 0
        %1820 = vmatprep.subr.bf16.mxu0 0
        %1821 = vmatpush2.bf16.msra.mxu0 0
        %1822 = vmatprep.subr.bf16.mxu0 0
        %1823 = vmatpush2.bf16.msra.mxu0 0
        %1824 = vmatprep.subr.bf16.mxu0 0
        %1825 = vmatpush2.bf16.msra.mxu0 %v1781
        %1826 = vmatprep.mubr.bf16.mxu0 %v1792
        %1827 = vmatmul.mubr.bf16.gmra.mxu0 %v1752
        %v1828 = vpop.f32.mrf.mxu0
        %v1829 = vadd.f32 %v1740, %v1828
        %v1830 = vpop.f32.mrf.mxu0
        %v1831 = vpop.f32.mrf.mxu0
        %v1832 = vadd.f32 %v1744, %v1831
        %v1833 = vpop.f32.mrf.mxu0
        %1834 = vdwg.mxu0
        %v1835 = vmul.f32 %v1829, 0.2
        %v1836 = vmul.f32 %v1832, 0.2
        %v1837 = vmax.f32 %v1829, %v1835
        %v1838 = vmax.f32 %v1832, %v1836
        %v1839 = vadd.f32 %v1837, %v1633
        %v1840 = vadd.f32 %v1838, %v1634
        %v1841 = vpack.c.bf16 %v1840, %v1839
        %v1842 = vld [vmem:[#allocation2 + $0x1b0] sm:$0xff]
        %v1843 = vld [vmem:[#allocation2 + $0x1b8] sm:$0xff]
        %v1846 = vunpack.c.l.b16 %v1842
        %v1847 = vunpack.c.h.b16 %v1842
        %v1848 = vunpack.c.l.b16 %v1843
        %v1849 = vunpack.c.h.b16 %v1843
        %v1850 = vpack.c.b16 %v1848, %v1846
        %v1851 = vpack.c.b16 %v1849, %v1847
        %v1855 = vsel %vm1259, %v1841, 0
        %1857 = vmatprep.subr.bf16.mxu0 0
        %1858 = vmatpush1.bf16.msra.mxu0 0
        %1859 = vmatprep.subr.bf16.mxu0 0
        %1860 = vmatpush1.bf16.msra.mxu0 0
        %1861 = vmatprep.subr.bf16.mxu0 0
        %1862 = vmatpush1.bf16.msra.mxu0 0
        %1863 = vmatprep.subr.bf16.mxu0 0
        %1864 = vmatpush1.bf16.msra.mxu0 0
        %1865 = vmatprep.subr.bf16.mxu0 0
        %1866 = vmatpush1.bf16.msra.mxu0 0
        %1867 = vmatprep.subr.bf16.mxu0 0
        %1868 = vmatpush1.bf16.msra.mxu0 0
        %1869 = vmatprep.subr.bf16.mxu0 0
        %1870 = vmatpush1.bf16.msra.mxu0 0
        %1871 = vmatprep.subr.bf16.mxu0 %v1851
        %1872 = vmatpush1.bf16.msra.mxu0 %v1850
        %1873 = vmatprep.subr.bf16.mxu0 0
        %1874 = vmatpush2.bf16.msra.mxu0 0
        %1875 = vmatprep.subr.bf16.mxu0 0
        %1876 = vmatpush2.bf16.msra.mxu0 0
        %1877 = vmatprep.subr.bf16.mxu0 0
        %1878 = vmatpush2.bf16.msra.mxu0 0
        %1879 = vmatprep.subr.bf16.mxu0 0
        %1880 = vmatpush2.bf16.msra.mxu0 0
        %1881 = vmatprep.subr.bf16.mxu0 0
        %1882 = vmatpush2.bf16.msra.mxu0 0
        %1883 = vmatprep.subr.bf16.mxu0 0
        %1884 = vmatpush2.bf16.msra.mxu0 0
        %1885 = vmatprep.subr.bf16.mxu0 0
        %1886 = vmatpush2.bf16.msra.mxu0 0
        %1887 = vmatprep.subr.bf16.mxu0 0
        %1888 = vmatpush2.bf16.msra.mxu0 0
        %1889 = vmatprep.mubr.bf16.mxu0 0
        %1890 = vmatmul.mubr.bf16.gmra.mxu0 %v1855
        %v1891 = vpop.f32.mrf.mxu0
        %v1892 = vadd.f32 0.0, %v1891
        %v1893 = vpop.f32.mrf.mxu0
        %v1894 = vadd.f32 0.0, %v1893
        %v1895 = vpop.f32.mrf.mxu0
        %v1896 = vadd.f32 0.0, %v1895
        %v1897 = vpop.f32.mrf.mxu0
        %v1898 = vadd.f32 0.0, %v1897
        %1899 = vdwg.mxu0
        %v1900 = vld [vmem:[%s4 + $0x30] sm:$0xff]
        %v1901 = vld [vmem:[%s4 + $0x38] sm:$0xff]
        %v1902 = vld [vmem:[%s4 + $0x40] sm:$0xff]
        %v1903 = vld [vmem:[%s4 + $0x48] sm:$0xff]
        %v1904 = vmul.f32 %v1892, %v1900
        %v1905 = vmul.f32 %v1894, %v1901
        %v1906 = vmul.f32 %v1896, %v1902
        %v1907 = vmul.f32 %v1898, %v1903
        %v1908 = vadd.f32 %v1904, %v1906
        %v1909 = vrot.slane %v1908, 4
        %v1910 = vadd.f32 %v1908, %v1909
        %v1911 = vrot.slane %v1910, 2
        %v1912 = vadd.f32 %v1910, %v1911
        %v1913 = vrot.slane %v1912, 1
        %v1914 = vadd.f32 %v1912, %v1913
        %v1915 = vadd.f32 %v1905, %v1907
        %v1916 = vrot.slane %v1915, 4
        %v1917 = vadd.f32 %v1915, %v1916
        %v1918 = vrot.slane %v1917, 2
        %v1919 = vadd.f32 %v1917, %v1918
        %v1920 = vrot.slane %v1919, 1
        %v1921 = vadd.f32 %v1919, %v1920
        %v1922 = vld [vmem:[#allocation2 + $0x1c0] sm:$0xf]
        %v1923 = vld [vmem:[#allocation2 + $0x1c8] sm:$0xf]
        %v1924 = vld [vmem:[#allocation2 + $0x1d0] sm:$0xf]
        %v1925 = vld [vmem:[#allocation2 + $0x1d8] sm:$0xf]
        %v1926 = vld [vmem:[#allocation2 + $0x1e0] sm:$0xf]
        %v1927 = vld [vmem:[#allocation2 + $0x1e8] sm:$0xf]
        %v1928 = vld [vmem:[#allocation2 + $0x1f0] sm:$0xf]
        %v1929 = vld [vmem:[#allocation2 + $0x1f8] sm:$0xf]
        %v1930 = vld [vmem:[#allocation2 + $0x200] sm:$0xf]
        %v1931 = vld [vmem:[#allocation2 + $0x208] sm:$0xf]
        %v1932 = vld [vmem:[#allocation2 + $0x210] sm:$0xf]
        %v1933 = vld [vmem:[#allocation2 + $0x218] sm:$0xf]
        %v1934 = vld [vmem:[#allocation2 + $0x220] sm:$0xf]
        %v1935 = vld [vmem:[#allocation2 + $0x228] sm:$0xf]
        %v1936 = vld [vmem:[#allocation2 + $0x230] sm:$0xf]
        %v1937 = vld [vmem:[#allocation2 + $0x238] sm:$0xf]
        %v1938 = vld [vmem:[#allocation2 + $0x240] sm:$0xf]
        %v1939 = vld [vmem:[#allocation2 + $0x248] sm:$0xf]
        %v1940 = vld [vmem:[#allocation2 + $0x250] sm:$0xf]
        %v1941 = vld [vmem:[#allocation2 + $0x258] sm:$0xf]
        %v1942 = vld [vmem:[#allocation2 + $0x260] sm:$0xf]
        %v1943 = vld [vmem:[#allocation2 + $0x268] sm:$0xf]
        %v1944 = vld [vmem:[#allocation2 + $0x270] sm:$0xf]
        %v1945 = vld [vmem:[#allocation2 + $0x278] sm:$0xf]
        %v1946 = vld [vmem:[#allocation2 + $0x280] sm:$0xf]
        %v1947 = vld [vmem:[#allocation2 + $0x288] sm:$0xf]
        %v1948 = vld [vmem:[#allocation2 + $0x290] sm:$0xf]
        %v1949 = vld [vmem:[#allocation2 + $0x298] sm:$0xf]
        %v1950 = vld [vmem:[#allocation2 + $0x2a0] sm:$0xf]
        %v1951 = vld [vmem:[#allocation2 + $0x2a8] sm:$0xf]
        %v1952 = vld [vmem:[#allocation2 + $0x2b0] sm:$0xf]
        %v1953 = vld [vmem:[#allocation2 + $0x2b8] sm:$0xf]
        %v1954 = vpack.c.bf16 %v1914, %v1914
        %v1955 = vpack.c.bf16 %v1921, %v1921
        %v1956 = vld [vmem:[%s4 + $0x50] ss:$0 sm:$0xff]
        %v1989 = vunpack.c.l.b16 %v1922
        %v1990 = vunpack.c.l.b16 %v1923
        %v1991 = vunpack.c.l.b16 %v1924
        %v1992 = vunpack.c.l.b16 %v1925
        %v1993 = vunpack.c.l.b16 %v1926
        %v1994 = vunpack.c.l.b16 %v1927
        %v1995 = vunpack.c.l.b16 %v1928
        %v1996 = vunpack.c.l.b16 %v1929
        %v1997 = vunpack.c.l.b16 %v1930
        %v1998 = vunpack.c.l.b16 %v1931
        %v1999 = vunpack.c.l.b16 %v1932
        %v2000 = vunpack.c.l.b16 %v1933
        %v2001 = vunpack.c.l.b16 %v1934
        %v2002 = vunpack.c.l.b16 %v1935
        %v2003 = vunpack.c.l.b16 %v1936
        %v2004 = vunpack.c.l.b16 %v1937
        %v2005 = vunpack.c.l.b16 %v1938
        %v2006 = vunpack.c.l.b16 %v1939
        %v2007 = vunpack.c.l.b16 %v1940
        %v2008 = vunpack.c.l.b16 %v1941
        %v2009 = vunpack.c.l.b16 %v1942
        %v2010 = vunpack.c.l.b16 %v1943
        %v2011 = vunpack.c.l.b16 %v1944
        %v2012 = vunpack.c.l.b16 %v1945
        %v2013 = vunpack.c.l.b16 %v1946
        %v2014 = vunpack.c.l.b16 %v1947
        %v2015 = vunpack.c.l.b16 %v1948
        %v2016 = vunpack.c.l.b16 %v1949
        %v2017 = vunpack.c.l.b16 %v1950
        %v2018 = vunpack.c.l.b16 %v1951
        %v2019 = vunpack.c.l.b16 %v1952
        %v2020 = vunpack.c.l.b16 %v1953
        %v2021 = vpack.c.b16 %v1990, %v1989
        %v2022 = vpack.c.b16 %v1992, %v1991
        %v2023 = vpack.c.b16 %v1994, %v1993
        %v2024 = vpack.c.b16 %v1996, %v1995
        %v2025 = vpack.c.b16 %v1998, %v1997
        %v2026 = vpack.c.b16 %v2000, %v1999
        %v2027 = vpack.c.b16 %v2002, %v2001
        %v2028 = vpack.c.b16 %v2004, %v2003
        %v2029 = vpack.c.b16 %v2006, %v2005
        %v2030 = vpack.c.b16 %v2008, %v2007
        %v2031 = vpack.c.b16 %v2010, %v2009
        %v2032 = vpack.c.b16 %v2012, %v2011
        %v2033 = vpack.c.b16 %v2014, %v2013
        %v2034 = vpack.c.b16 %v2016, %v2015
        %v2035 = vpack.c.b16 %v2018, %v2017
        %v2036 = vpack.c.b16 %v2020, %v2019
        %2053 = vmatprep.subr.bf16.mxu0 0
        %2054 = vmatpush1.bf16.msra.mxu0 %v2028
        %2055 = vmatprep.subr.bf16.mxu0 0
        %2056 = vmatpush1.bf16.msra.mxu0 %v2027
        %2057 = vmatprep.subr.bf16.mxu0 0
        %2058 = vmatpush1.bf16.msra.mxu0 %v2026
        %2059 = vmatprep.subr.bf16.mxu0 0
        %2060 = vmatpush1.bf16.msra.mxu0 %v2025
        %2061 = vmatprep.subr.bf16.mxu0 0
        %2062 = vmatpush1.bf16.msra.mxu0 %v2024
        %2063 = vmatprep.subr.bf16.mxu0 0
        %2064 = vmatpush1.bf16.msra.mxu0 %v2023
        %2065 = vmatprep.subr.bf16.mxu0 0
        %2066 = vmatpush1.bf16.msra.mxu0 %v2022
        %2067 = vmatprep.subr.bf16.mxu0 0
        %2068 = vmatpush1.bf16.msra.mxu0 %v2021
        %2069 = vmatprep.subr.bf16.mxu0 0
        %2070 = vmatpush2.bf16.msra.mxu0 %v2036
        %2071 = vmatprep.subr.bf16.mxu0 0
        %2072 = vmatpush2.bf16.msra.mxu0 %v2035
        %2073 = vmatprep.subr.bf16.mxu0 0
        %2074 = vmatpush2.bf16.msra.mxu0 %v2034
        %2075 = vmatprep.subr.bf16.mxu0 0
        %2076 = vmatpush2.bf16.msra.mxu0 %v2033
        %2077 = vmatprep.subr.bf16.mxu0 0
        %2078 = vmatpush2.bf16.msra.mxu0 %v2032
        %2079 = vmatprep.subr.bf16.mxu0 0
        %2080 = vmatpush2.bf16.msra.mxu0 %v2031
        %2081 = vmatprep.subr.bf16.mxu0 0
        %2082 = vmatpush2.bf16.msra.mxu0 %v2030
        %2083 = vmatprep.subr.bf16.mxu0 0
        %2084 = vmatpush2.bf16.msra.mxu0 %v2029
        %2085 = vmatprep.mubr.bf16.mxu0 %v1955
        %2086 = vmatmul.mubr.bf16.gmra.mxu0 %v1954
        %v2087 = vpop.f32.mrf.mxu0
        %v2088 = vadd.f32 %v1956, %v2087
        %v2089 = vpop.f32.mrf.mxu0
        %v2090 = vpop.f32.mrf.mxu0
        %v2091 = vpop.f32.mrf.mxu0
        %2092 = vdwg.mxu0
        %v2093 = vld [vmem:[%s246] sm:$0x1]
        %v2094 = vmul.f32 %v2093, %v2088
        %vm2095 = vcmask 122880
        %v2096 = vsel %vm2095, %v2094, 0.0
        %2097 = vadd.xlane.f32.xlu0 %v2096
        %v2098 = vpop.xlane.xlu0 %2097
        %vm2099 = vcmask 0
        %2100 = vst.msk [vmem:[%s249] sm:$0x1] %vm2099, %v2098
        %p2101 = scmp.lt.s32.totalorder %s17, 1
        %s2102 = scalar_select %p2101, %s17, 1
        %s2103 = scalar_lea.vmem %s5, %s2102
        // Predicated region
        $region45: #{forward.1} parent=39 // pred_check
          %p2104 = pneg %p150
        $region46: #{forward.1} parent=39 // pred_check_branch
          %2106 = sbr.rel (%p2104) target = $region48
        $region47: #{forward.1} parent=39 // pred_region
          _
        $region48: #{forward.1} parent=39 // pred_fallthru
          _
      $region40: #{forward.1} parent=5 // pred_fallthru
        _
      %p2107 = scmp.le.s32.totalorder 2, %s12
      // Predicated region
      $region49: #{forward.1} parent=5 // pred_check
        %p2108 = pneg %p2107
      $region50: #{forward.1} parent=5 // pred_check_branch
        %2110 = sbr.rel (%p2108) target = $region52
      $region51: #{forward.1} parent=5 // pred_region
        %s2111 = ssub.s32 %s12, 2
        // Predicated region
        $region53: #{forward.1} parent=51 // pred_check
          %p2112 = pneg %p156
        $region54: #{forward.1} parent=51 // pred_check_branch
          %2114 = sbr.rel (%p2112) target = $region56
        $region55: #{forward.1} parent=51 // pred_region
          %p2115 = scmp.lt.s32.totalorder %s18, 1
          %s2116 = scalar_select %p2115, %s18, 1
          %s2117 = scalar_lea.vmem %s5, %s2116
        $region56: #{forward.1} parent=51 // pred_fallthru
          _
      $region52: #{forward.1} parent=5 // pred_fallthru
        _
    $region6: #{forward.1} parent=1 // loop_footer
      %s16 = sadd.s32 1, %s12
    $region7: #{forward.1} parent=1 // loop_footer_branch
      %11 = sbr.rel target = $region3
    $region8: #{forward.1} parent=1 // loop_exit
      _
    %2118 = vsyncpa [#allocation3], 1
    %s2119 = scalar_lea.sflag [#allocation3], 1
    %2120 = vsyncpa %s2119, 1

</llo_original>
